<compile_context>
chip_gen: v7x
topology: tpu7x:2x2x1
jax: 0.10.0
libtpu: 0.0.40
codegen_flags: <defaults>
</compile_context>

<pallas_src>
import jax
import jax.numpy as jnp
import numpy as np
from jax import lax
from jax.experimental import pallas as pl
from jax.experimental.pallas import tpu as pltpu


MXU_DTYPE = jnp.bfloat16        # MXU operand / conv-intermediate dtype (accum stays f32)
ACT_DTYPE = jnp.bfloat16        # inter-layer pooled-activation storage dtype
ROW_TILE = 1024                 # pooled-output rows per grid step (x4 conv rows)
BN_EPS = 1e-5
VMEM_LIMIT = 32 * 1024 * 1024


def _round_up(x, d):
    return (x + d - 1) // d * d


def _pick_tiling(m):
    """Row tile (pooled positions) and padded row count. Multiples of 32 so f32/bf16
    sublane tiling constraints are always met."""
    if m >= ROW_TILE:
        return ROW_TILE, _round_up(m, ROW_TILE)
    mp = _round_up(m, 32)
    return mp, mp


# ----------------------------------------------------------------------------
# Pallas kernels
# ----------------------------------------------------------------------------
def _conv_stats_kernel(p_ref, w_ref, conv_ref, s1_ref, s2_ref):
    """Pass 1: packed conv (single K=9*Cin MXU dot) + BN sum / sum-of-squares.

    p_ref    : (4, TM, 9*Cin) bf16  im2col patches; leading axis = 2x2 window position.
    w_ref    : (9*Cin, Cout)  bf16  flattened conv weights.
    conv_ref : (4, TM, Cout)  bf16  pre-BN conv output (consumed by pass 2).
    s1_ref, s2_ref : (1, 1, Cout) f32 partial sums for this "parallel" slice,
                     accumulated across the inner ("arbitrary") tile axis.
    """
    @pl.when(pl.program_id(1) == 0)
    def _():
        s1_ref[...] = jnp.zeros_like(s1_ref)
        s2_ref[...] = jnp.zeros_like(s2_ref)

    four, tm, k = p_ref.shape
    # One big dot instead of 4 small ones: (4*TM, K) x (K, Cout) -> f32.
    c = jnp.dot(p_ref[...].reshape(four * tm, k), w_ref[...],
                preferred_element_type=jnp.float32)
    s1_ref[...] += jnp.sum(c, axis=0).reshape(1, 1, -1)
    s2_ref[...] += jnp.sum(c * c, axis=0).reshape(1, 1, -1)
    conv_ref[...] = c.reshape(four, tm, -1).astype(conv_ref.dtype)


def _bn_relu_pool_kernel(c_ref, scale_ref, shift_ref, o_ref):
    """Pass 2: BN affine + ReLU + 2x2 max-pool from the stored conv output.

    c_ref : (4, TM, Cout) bf16 pre-BN conv output; scale/shift: (1, Cout) f32.
    o_ref : (TM, Cout) bf16 pooled activations.
    """
    y = c_ref[...].astype(jnp.float32) * scale_ref[...] + shift_ref[...]
    o_ref[...] = jnp.maximum(jnp.max(y, axis=0), 0.0).astype(o_ref.dtype)


def _bn_relu_pool_final_kernel(c_ref, scale_ref, shift_ref, wf_ref, enc_ref, o_ref):
    """Pass 2 of the LAST layer, fused with the final 1x1 conv + residual add.

    o_ref : (TM, target_dim) f32, written in place over the enc buffer (aliased).
    """
    y = c_ref[...].astype(jnp.float32) * scale_ref[...] + shift_ref[...]
    pooled = jnp.maximum(jnp.max(y, axis=0), 0.0)
    o_ref[...] = (
        jnp.dot(pooled.astype(wf_ref.dtype), wf_ref[...],
                preferred_element_type=jnp.float32)
        + enc_ref[...]
    )


# ----------------------------------------------------------------------------
# Wrappers (glue: im2col packing / padding / reshapes only)
# ----------------------------------------------------------------------------
def _im2col_pool_groups(x_nhwc):
    """(N,H,W,Cin) -> patches (4, M, 9*Cin).

    Leading axis = 2x2 pooling-window position p = py*2+px, rows m = (n, ho, wo),
    lanes = packed 3x3xCin contraction (dy, dx, c)."""
    n, h, w, cin = x_nhwc.shape
    ho, wo = h // 2, w // 2
    m = n * ho * wo
    xpad = jnp.pad(x_nhwc, ((0, 0), (1, 1), (1, 1), (0, 0)))
    cols = jnp.concatenate(
        [xpad[:, dy:dy + h, dx:dx + w, :] for dy in range(3) for dx in range(3)],
        axis=-1,
    )
    cols = cols.reshape(n, ho, 2, wo, 2, 9 * cin)
    patches = jnp.transpose(cols, (2, 4, 0, 1, 3, 5)).reshape(4, m, 9 * cin)
    return patches, m, ho, wo


def conv_bn_relu_pool(x_nhwc, w_hwio, gamma, beta, fuse_final=None):
    """One layer: Conv3x3(SAME) -> BN(batch stats) -> ReLU -> MaxPool2x2.

    If fuse_final=(w_final, enc_nhwc), the final 1x1 conv + residual add is fused into
    the BN/ReLU/pool pass and the f32 result is returned instead of bf16 activations.
    """
    n, h, wdt, cin = x_nhwc.shape
    cout = w_hwio.shape[-1]
    k = 9 * cin

    patches, m, ho, wo = _im2col_pool_groups(x_nhwc.astype(MXU_DTYPE))
    tm, m_pad = _pick_tiling(m)
    n_tiles = m_pad // tm
    # v7x megacore: give the stats pass a size-2 "parallel" axis when >= 2 tiles.
    n_split = 2 if n_tiles >= 2 else 1
    if n_tiles % n_split:
        m_pad += tm
        n_tiles += 1
    tiles_per_split = n_tiles // n_split
    if m_pad != m:
        patches = jnp.pad(patches, ((0, 0), (0, m_pad - m), (0, 0)))

    w_flat = w_hwio.reshape(k, cout).astype(MXU_DTYPE)

    # ---------------- Pass 1: conv + BN statistics (patches read exactly once) -------
    conv_out, s1, s2 = pl.pallas_call(
        _conv_stats_kernel,
        out_shape=(
            jax.ShapeDtypeStruct((4, m_pad, cout), MXU_DTYPE),
            jax.ShapeDtypeStruct((n_split, 1, cout), jnp.float32),
            jax.ShapeDtypeStruct((n_split, 1, cout), jnp.float32),
        ),
        grid=(n_split, tiles_per_split),
        in_specs=[
            pl.BlockSpec((4, tm, k), lambda c, t: (0, c * tiles_per_split + t, 0)),
            pl.BlockSpec((k, cout), lambda c, t: (0, 0)),
        ],
        out_specs=(
            pl.BlockSpec((4, tm, cout), lambda c, t: (0, c * tiles_per_split + t, 0)),
            pl.BlockSpec((1, 1, cout), lambda c, t: (c, 0, 0)),
            pl.BlockSpec((1, 1, cout), lambda c, t: (c, 0, 0)),
        ),
        compiler_params=pltpu.CompilerParams(
            dimension_semantics=("parallel", "arbitrary"),
            vmem_limit_bytes=VMEM_LIMIT),
    )(patches, w_flat)

    # Tiny epilogue (wrapper): combine per-core partials, compute BN scale/shift in f32.
    count = jnp.float32(4 * m)  # padded rows are zero and excluded from count
    s1_tot = jnp.sum(s1, axis=0)                      # (1, cout)
    s2_tot = jnp.sum(s2, axis=0)
    mean = s1_tot / count
    var = jnp.maximum(s2_tot / count - mean * mean, 0.0)   # clamp (review note)
    scale = gamma.reshape(1, cout).astype(jnp.float32) * lax.rsqrt(var + BN_EPS)
    shift = beta.reshape(1, cout).astype(jnp.float32) - mean * scale

    conv_spec = pl.BlockSpec((4, tm, cout), lambda i: (0, i, 0))
    vec_spec = pl.BlockSpec((1, cout), lambda i: (0, 0))

    # ---------------- Pass 2: BN + ReLU + pool (reads Cout-wide conv output) ---------
    if fuse_final is None:
        pooled = pl.pallas_call(
            _bn_relu_pool_kernel,
            out_shape=jax.ShapeDtypeStruct((m_pad, cout), ACT_DTYPE),
            grid=(n_tiles,),
            in_specs=[conv_spec, vec_spec, vec_spec],
            out_specs=pl.BlockSpec((tm, cout), lambda i: (i, 0)),
            compiler_params=pltpu.CompilerParams(
                dimension_semantics=("parallel",),
                vmem_limit_bytes=VMEM_LIMIT),
        )(conv_out, scale, shift)
        return pooled[:m].reshape(n, ho, wo, cout)

    # Last layer: fuse final 1x1 conv + residual; write in place over the enc buffer.
    w_final, enc_nhwc = fuse_final
    td = w_final.shape[-1]
    enc2d = enc_nhwc.reshape(m, td).astype(jnp.float32)
    if m_pad != m:
        enc2d = jnp.pad(enc2d, ((0, m_pad - m), (0, 0)))
    out2d = pl.pallas_call(
        _bn_relu_pool_final_kernel,
        out_shape=jax.ShapeDtypeStruct((m_pad, td), jnp.float32),
        grid=(n_tiles,),
        in_specs=[conv_spec, vec_spec, vec_spec,
                  pl.BlockSpec((cout, td), lambda i: (0, 0)),
                  pl.BlockSpec((tm, td), lambda i: (i, 0))],
        out_specs=pl.BlockSpec((tm, td), lambda i: (i, 0)),
        input_output_aliases={4: 0},   # residual add in place over enc (a fresh temp)
        compiler_params=pltpu.CompilerParams(
            dimension_semantics=("parallel",),
            vmem_limit_bytes=VMEM_LIMIT),
    )(conv_out, scale, shift, w_final.astype(MXU_DTYPE), enc2d)
    return out2d[:m].reshape(n, ho, wo, td)


@jax.jit
def memory_encoder_forward(x_nchw, enc_nchw, layers, w_final):
    x = jnp.transpose(x_nchw.astype(jnp.float32), (0, 2, 3, 1))      # -> NHWC
    enc_nhwc = jnp.transpose(enc_nchw.astype(jnp.float32), (0, 2, 3, 1))
    num_layers = len(layers)
    for li, (w, gamma, beta) in enumerate(layers):
        fuse = (w_final, enc_nhwc) if li == num_layers - 1 else None
        x = conv_bn_relu_pool(x, w, gamma, beta, fuse_final=fuse)
    return jnp.transpose(x, (0, 3, 1, 2))                            # -> NCHW


# ----------------------------------------------------------------------------
# Deterministic parameter init (synthetic; no checkpoint loading)
# ----------------------------------------------------------------------------
def init_params(key, input_dim, target_dim, num_layers):
    layers = []
    c = input_dim
    for _ in range(num_layers):
        key, k1, k2, k3 = jax.random.split(key, 4)
        fan_in = 3 * 3 * c
        w = jax.random.normal(k1, (3, 3, c, 2 * c), jnp.float32) / np.sqrt(fan_in)
        gamma = 1.0 + 0.1 * jax.random.normal(k2, (2 * c,), jnp.float32)
        beta = 0.1 * jax.random.normal(k3, (2 * c,), jnp.float32)
        layers.append((w, gamma, beta))
        c *= 2
    key, kf = jax.random.split(key)
    w_final = jax.random.normal(kf, (c, target_dim), jnp.float32) / np.sqrt(c)
    return layers, w_final


# ----------------------------------------------------------------------------
# Pure-JAX f32 reference (for correctness check)
# ----------------------------------------------------------------------------
def ref_forward(x_nchw, enc_nchw, layers, w_final):
    x = x_nchw.astype(jnp.float32)
    for (w, gamma, beta) in layers:
        x = lax.conv_general_dilated(
            x, w, (1, 1), "SAME",
            dimension_numbers=("NCHW", "HWIO", "NCHW"),
            precision=lax.Precision.HIGHEST,
        )
        mean = jnp.mean(x, axis=(0, 2, 3), keepdims=True)
        var = jnp.mean((x - mean) ** 2, axis=(0, 2, 3), keepdims=True)
        x = (x - mean) / jnp.sqrt(var + BN_EPS) * gamma.reshape(1, -1, 1, 1) \
            + beta.reshape(1, -1, 1, 1)
        x = jnp.maximum(x, 0.0)
        x = lax.reduce_window(x, -jnp.inf, lax.max, (1, 1, 2, 2), (1, 1, 2, 2), "VALID")
    x = jnp.einsum("nchw,cd->ndhw", x, w_final, precision=lax.Precision.HIGHEST)
    return x + enc_nchw.astype(jnp.float32)


if __name__ == "__main__":
    # Small shapes consistent with the module's forward.
    N, input_dim, H, W = 2, 4, 16, 16
    num_layers, target_dim = 2, 32
    Ho, Wo = H // (2 ** num_layers), W // (2 ** num_layers)

    key = jax.random.PRNGKey(0)
    key, kx, ke, kp = jax.random.split(key, 4)
    x = jax.random.normal(kx, (N, input_dim, H, W), jnp.float32)
    encoded_frame = jax.random.normal(ke, (N, target_dim, Ho, Wo), jnp.float32)
    layers, w_final = init_params(kp, input_dim, target_dim, num_layers)

    out = memory_encoder_forward(x, encoded_frame, layers, w_final)
    out = jax.block_until_ready(out)
    assert out.shape == (N, target_dim, Ho, Wo)

    ref = ref_forward(x, encoded_frame, layers, w_final)
    # Tolerance accounts for bf16 MXU operands, bf16 inter-layer activations and the
    # bf16 conv intermediate (all per perf guidance) vs. an f32-HIGHEST reference;
    # accumulation and BN/ReLU/pool math are f32 (observed worst-case dev ~1.5e-2).
    np.testing.assert_allclose(np.asarray(out), np.asarray(ref), rtol=5e-2, atol=5e-2)

    print("KERNEL_OK")
</pallas_src>

<mosaic_0001>
module attributes {stable_mosaic.version = 11 : i64} {
  func.func @_bn_relu_pool_kernel(%arg0: i32, %arg1: memref<4x128x8xbf16, #tpu.memory_space<vmem>>, %arg2: memref<1x8xf32, #tpu.memory_space<vmem>>, %arg3: memref<1x8xf32, #tpu.memory_space<vmem>>, %arg4: memref<128x8xbf16, #tpu.memory_space<vmem>>) attributes {dimension_semantics = [#tpu.dimension_semantics<parallel>], iteration_bounds = array<i64: 1>, scalar_prefetch = 0 : i64, scratch_operands = 0 : i64, tpu.core_type = #tpu.core_type<tc>, window_params = [{transform_indices = @transform_0, window_bounds = array<i64: 4, 128, 8>}, {pipeline_mode = #tpu.pipeline_mode<synchronous>, transform_indices = @transform_1, window_bounds = array<i64: 1, 8>}, {pipeline_mode = #tpu.pipeline_mode<synchronous>, transform_indices = @transform_2, window_bounds = array<i64: 1, 8>}, {transform_indices = @transform_3, window_bounds = array<i64: 128, 8>}]} {
    %c0 = arith.constant 0 : index
    %c0_0 = arith.constant 0 : index
    %c0_1 = arith.constant 0 : index
    %0 = vector.load %arg1[%c0, %c0_0, %c0_1] : memref<4x128x8xbf16, #tpu.memory_space<vmem>>, vector<4x128x8xbf16>
    %1 = arith.extf %0 : vector<4x128x8xbf16> to vector<4x128x8xf32>
    %c0_2 = arith.constant 0 : index
    %c0_3 = arith.constant 0 : index
    %2 = vector.load %arg2[%c0_2, %c0_3] : memref<1x8xf32, #tpu.memory_space<vmem>>, vector<1x8xf32>
    %3 = vector.shape_cast %2 : vector<1x8xf32> to vector<1x1x8xf32>
    %4 = vector.broadcast %3 : vector<1x1x8xf32> to vector<4x128x8xf32>
    %5 = arith.mulf %1, %4 : vector<4x128x8xf32>
    %c0_4 = arith.constant 0 : index
    %c0_5 = arith.constant 0 : index
    %6 = vector.load %arg3[%c0_4, %c0_5] : memref<1x8xf32, #tpu.memory_space<vmem>>, vector<1x8xf32>
    %7 = vector.shape_cast %6 : vector<1x8xf32> to vector<1x1x8xf32>
    %8 = vector.broadcast %7 : vector<1x1x8xf32> to vector<4x128x8xf32>
    %9 = arith.addf %5, %8 : vector<4x128x8xf32>
    %cst = arith.constant dense<0xFF800000> : vector<128x8xf32>
    %10 = vector.multi_reduction <maximumf>, %9, %cst [0] : vector<4x128x8xf32> to vector<128x8xf32>
    %cst_6 = arith.constant 0.000000e+00 : f32
    %11 = vector.broadcast %cst_6 : f32 to vector<128x8xf32>
    %12 = arith.maximumf %10, %11 : vector<128x8xf32>
    %13 = arith.truncf %12 : vector<128x8xf32> to vector<128x8xbf16>
    %c0_7 = arith.constant 0 : index
    %c0_8 = arith.constant 0 : index
    %14 = vector.load %arg4[%c0_7, %c0_8] : memref<128x8xbf16, #tpu.memory_space<vmem>>, vector<128x8xbf16>
    tpu.vector_store %arg4[%c0_7, %c0_8], %13 {strides = array<i32>} : memref<128x8xbf16, #tpu.memory_space<vmem>>, vector<128x8xbf16>,
    return
  }
  func.func @transform_0(%arg0: i32) -> (i32, i32, i32) {
    %c0_i32 = arith.constant 0 : i32
    %c0_i32_0 = arith.constant 0 : i32
    %c0_i32_1 = arith.constant 0 : i32
    return %c0_i32, %arg0, %c0_i32_0 : i32, i32, i32
  }
  func.func @transform_1(%arg0: i32) -> (i32, i32) {
    %c0_i32 = arith.constant 0 : i32
    %c0_i32_0 = arith.constant 0 : i32
    %c0_i32_1 = arith.constant 0 : i32
    return %c0_i32, %c0_i32_0 : i32, i32
  }
  func.func @transform_2(%arg0: i32) -> (i32, i32) {
    %c0_i32 = arith.constant 0 : i32
    %c0_i32_0 = arith.constant 0 : i32
    %c0_i32_1 = arith.constant 0 : i32
    return %c0_i32, %c0_i32_0 : i32, i32
  }
  func.func @transform_3(%arg0: i32) -> (i32, i32) {
    %c0_i32 = arith.constant 0 : i32
    %c0_i32_0 = arith.constant 0 : i32
    return %arg0, %c0_i32 : i32, i32
  }
}

module attributes {stable_mosaic.version = 11 : i64} {
  func.func @_conv_stats_kernel(%arg0: i32, %arg1: i32, %arg2: memref<4x128x36xbf16, #tpu.memory_space<vmem>>, %arg3: memref<36x8xbf16, #tpu.memory_space<vmem>>, %arg4: memref<4x128x8xbf16, #tpu.memory_space<vmem>>, %arg5: memref<1x1x8xf32, #tpu.memory_space<vmem>>, %arg6: memref<1x1x8xf32, #tpu.memory_space<vmem>>) attributes {dimension_semantics = [#tpu.dimension_semantics<parallel>, #tpu.dimension_semantics<arbitrary>], iteration_bounds = array<i64: 1, 1>, scalar_prefetch = 0 : i64, scratch_operands = 0 : i64, tpu.core_type = #tpu.core_type<tc>, window_params = [{transform_indices = @transform_0, window_bounds = array<i64: 4, 128, 36>}, {pipeline_mode = #tpu.pipeline_mode<synchronous>, transform_indices = @transform_1, window_bounds = array<i64: 36, 8>}, {transform_indices = @transform_2, window_bounds = array<i64: 4, 128, 8>}, {transform_indices = @transform_3, window_bounds = array<i64: 1, 1, 8>}, {transform_indices = @transform_4, window_bounds = array<i64: 1, 1, 8>}]} {
    %c0_i32 = arith.constant 0 : i32
    %0 = arith.cmpi eq, %arg1, %c0_i32 : i32
    %1 = arith.extui %0 : i1 to i32
    %c0_i32_0 = arith.constant 0 : i32
    %2 = arith.cmpi ne, %1, %c0_i32_0 : i32
    scf.if %2 {
      %cst_22 = arith.constant 0.000000e+00 : f32
      %21 = vector.broadcast %cst_22 : f32 to vector<1x1x8xf32>
      %c0_23 = arith.constant 0 : index
      %c0_24 = arith.constant 0 : index
      %c0_25 = arith.constant 0 : index
      %22 = vector.load %arg5[%c0_23, %c0_24, %c0_25] : memref<1x1x8xf32, #tpu.memory_space<vmem>>, vector<1x1x8xf32>
      tpu.vector_store %arg5[%c0_23, %c0_24, %c0_25], %21 {strides = array<i32>} : memref<1x1x8xf32, #tpu.memory_space<vmem>>, vector<1x1x8xf32>,
      %cst_26 = arith.constant 0.000000e+00 : f32
      %23 = vector.broadcast %cst_26 : f32 to vector<1x1x8xf32>
      %c0_27 = arith.constant 0 : index
      %c0_28 = arith.constant 0 : index
      %c0_29 = arith.constant 0 : index
      %24 = vector.load %arg6[%c0_27, %c0_28, %c0_29] : memref<1x1x8xf32, #tpu.memory_space<vmem>>, vector<1x1x8xf32>
      tpu.vector_store %arg6[%c0_27, %c0_28, %c0_29], %23 {strides = array<i32>} : memref<1x1x8xf32, #tpu.memory_space<vmem>>, vector<1x1x8xf32>,
    } else {
    }
    %c0 = arith.constant 0 : index
    %c0_1 = arith.constant 0 : index
    %c0_2 = arith.constant 0 : index
    %3 = vector.load %arg2[%c0, %c0_1, %c0_2] : memref<4x128x36xbf16, #tpu.memory_space<vmem>>, vector<4x128x36xbf16>
    %4 = vector.shape_cast %3 : vector<4x128x36xbf16> to vector<512x36xbf16>
    %c0_3 = arith.constant 0 : index
    %c0_4 = arith.constant 0 : index
    %5 = vector.load %arg3[%c0_3, %c0_4] : memref<36x8xbf16, #tpu.memory_space<vmem>>, vector<36x8xbf16>
    %cst = arith.constant dense<0.000000e+00> : vector<512x8xf32>
    %6 = tpu.matmul %4, %5, %cst {dimension_numbers = #tpu.dot_dimension_numbers<[1], [0], [0], [1], [0, 0, 1, 1], [], []>} : vector<512x36xbf16>, vector<36x8xbf16>, vector<512x8xf32> -> vector<512x8xf32>
    %c0_5 = arith.constant 0 : index
    %c0_6 = arith.constant 0 : index
    %c0_7 = arith.constant 0 : index
    %7 = vector.load %arg5[%c0_5, %c0_6, %c0_7] : memref<1x1x8xf32, #tpu.memory_space<vmem>>, vector<1x1x8xf32>
    %cst_8 = arith.constant dense<0.000000e+00> : vector<8xf32>
    %8 = vector.multi_reduction <add>, %6, %cst_8 [0] : vector<512x8xf32> to vector<8xf32>
    %9 = vector.shape_cast %8 : vector<8xf32> to vector<1x1x8xf32>
    %10 = arith.addf %7, %9 : vector<1x1x8xf32>
    %c0_9 = arith.constant 0 : index
    %c0_10 = arith.constant 0 : index
    %c0_11 = arith.constant 0 : index
    %11 = vector.load %arg5[%c0_9, %c0_10, %c0_11] : memref<1x1x8xf32, #tpu.memory_space<vmem>>, vector<1x1x8xf32>
    tpu.vector_store %arg5[%c0_9, %c0_10, %c0_11], %10 {strides = array<i32>} : memref<1x1x8xf32, #tpu.memory_space<vmem>>, vector<1x1x8xf32>,
    %c0_12 = arith.constant 0 : index
    %c0_13 = arith.constant 0 : index
    %c0_14 = arith.constant 0 : index
    %12 = vector.load %arg6[%c0_12, %c0_13, %c0_14] : memref<1x1x8xf32, #tpu.memory_space<vmem>>, vector<1x1x8xf32>
    %13 = arith.mulf %6, %6 : vector<512x8xf32>
    %cst_15 = arith.constant dense<0.000000e+00> : vector<8xf32>
    %14 = vector.multi_reduction <add>, %13, %cst_15 [0] : vector<512x8xf32> to vector<8xf32>
    %15 = vector.shape_cast %14 : vector<8xf32> to vector<1x1x8xf32>
    %16 = arith.addf %12, %15 : vector<1x1x8xf32>
    %c0_16 = arith.constant 0 : index
    %c0_17 = arith.constant 0 : index
    %c0_18 = arith.constant 0 : index
    %17 = vector.load %arg6[%c0_16, %c0_17, %c0_18] : memref<1x1x8xf32, #tpu.memory_space<vmem>>, vector<1x1x8xf32>
    tpu.vector_store %arg6[%c0_16, %c0_17, %c0_18], %16 {strides = array<i32>} : memref<1x1x8xf32, #tpu.memory_space<vmem>>, vector<1x1x8xf32>,
    %18 = vector.shape_cast %6 : vector<512x8xf32> to vector<4x128x8xf32>
    %19 = arith.truncf %18 : vector<4x128x8xf32> to vector<4x128x8xbf16>
    %c0_19 = arith.constant 0 : index
    %c0_20 = arith.constant 0 : index
    %c0_21 = arith.constant 0 : index
    %20 = vector.load %arg4[%c0_19, %c0_20, %c0_21] : memref<4x128x8xbf16, #tpu.memory_space<vmem>>, vector<4x128x8xbf16>
    tpu.vector_store %arg4[%c0_19, %c0_20, %c0_21], %19 {strides = array<i32>} : memref<4x128x8xbf16, #tpu.memory_space<vmem>>, vector<4x128x8xbf16>,
    return
  }
  func.func @transform_0(%arg0: i32, %arg1: i32) -> (i32, i32, i32) {
    %c1_i32 = arith.constant 1 : i32
    %0 = arith.muli %arg0, %c1_i32 : i32
    %1 = arith.addi %0, %arg1 : i32
    %c0_i32 = arith.constant 0 : i32
    %c0_i32_0 = arith.constant 0 : i32
    %c0_i32_1 = arith.constant 0 : i32
    return %c0_i32, %1, %c0_i32_0 : i32, i32, i32
  }
  func.func @transform_1(%arg0: i32, %arg1: i32) -> (i32, i32) {
    %c0_i32 = arith.constant 0 : i32
    %c0_i32_0 = arith.constant 0 : i32
    %c0_i32_1 = arith.constant 0 : i32
    return %c0_i32, %c0_i32_0 : i32, i32
  }
  func.func @transform_2(%arg0: i32, %arg1: i32) -> (i32, i32, i32) {
    %c1_i32 = arith.constant 1 : i32
    %0 = arith.muli %arg0, %c1_i32 : i32
    %1 = arith.addi %0, %arg1 : i32
    %c0_i32 = arith.constant 0 : i32
    %c0_i32_0 = arith.constant 0 : i32
    %c0_i32_1 = arith.constant 0 : i32
    return %c0_i32, %1, %c0_i32_0 : i32, i32, i32
  }
  func.func @transform_3(%arg0: i32, %arg1: i32) -> (i32, i32, i32) {
    %c0_i32 = arith.constant 0 : i32
    %c0_i32_0 = arith.constant 0 : i32
    %c0_i32_1 = arith.constant 0 : i32
    return %arg0, %c0_i32, %c0_i32_0 : i32, i32, i32
  }
  func.func @transform_4(%arg0: i32, %arg1: i32) -> (i32, i32, i32) {
    %c0_i32 = arith.constant 0 : i32
    %c0_i32_0 = arith.constant 0 : i32
    %c0_i32_1 = arith.constant 0 : i32
    return %arg0, %c0_i32, %c0_i32_0 : i32, i32, i32
  }
}

module attributes {stable_mosaic.version = 11 : i64} {
  func.func @_bn_relu_pool_final_kernel(%arg0: i32, %arg1: memref<4x32x16xbf16, #tpu.memory_space<vmem>>, %arg2: memref<1x16xf32, #tpu.memory_space<vmem>>, %arg3: memref<1x16xf32, #tpu.memory_space<vmem>>, %arg4: memref<16x32xbf16, #tpu.memory_space<vmem>>, %arg5: memref<32x32xf32, #tpu.memory_space<vmem>>, %arg6: memref<32x32xf32, #tpu.memory_space<vmem>>) attributes {dimension_semantics = [#tpu.dimension_semantics<parallel>], iteration_bounds = array<i64: 1>, scalar_prefetch = 0 : i64, scratch_operands = 0 : i64, tpu.core_type = #tpu.core_type<tc>, window_params = [{transform_indices = @transform_0, window_bounds = array<i64: 4, 32, 16>}, {pipeline_mode = #tpu.pipeline_mode<synchronous>, transform_indices = @transform_1, window_bounds = array<i64: 1, 16>}, {pipeline_mode = #tpu.pipeline_mode<synchronous>, transform_indices = @transform_2, window_bounds = array<i64: 1, 16>}, {pipeline_mode = #tpu.pipeline_mode<synchronous>, transform_indices = @transform_3, window_bounds = array<i64: 16, 32>}, {transform_indices = @transform_4, window_bounds = array<i64: 32, 32>}, {transform_indices = @transform_5, window_bounds = array<i64: 32, 32>}]} {
    %c0 = arith.constant 0 : index
    %c0_0 = arith.constant 0 : index
    %c0_1 = arith.constant 0 : index
    %0 = vector.load %arg1[%c0, %c0_0, %c0_1] : memref<4x32x16xbf16, #tpu.memory_space<vmem>>, vector<4x32x16xbf16>
    %1 = arith.extf %0 : vector<4x32x16xbf16> to vector<4x32x16xf32>
    %c0_2 = arith.constant 0 : index
    %c0_3 = arith.constant 0 : index
    %2 = vector.load %arg2[%c0_2, %c0_3] : memref<1x16xf32, #tpu.memory_space<vmem>>, vector<1x16xf32>
    %3 = vector.shape_cast %2 : vector<1x16xf32> to vector<1x1x16xf32>
    %4 = vector.broadcast %3 : vector<1x1x16xf32> to vector<4x32x16xf32>
    %5 = arith.mulf %1, %4 : vector<4x32x16xf32>
    %c0_4 = arith.constant 0 : index
    %c0_5 = arith.constant 0 : index
    %6 = vector.load %arg3[%c0_4, %c0_5] : memref<1x16xf32, #tpu.memory_space<vmem>>, vector<1x16xf32>
    %7 = vector.shape_cast %6 : vector<1x16xf32> to vector<1x1x16xf32>
    %8 = vector.broadcast %7 : vector<1x1x16xf32> to vector<4x32x16xf32>
    %9 = arith.addf %5, %8 : vector<4x32x16xf32>
    %cst = arith.constant dense<0xFF800000> : vector<32x16xf32>
    %10 = vector.multi_reduction <maximumf>, %9, %cst [0] : vector<4x32x16xf32> to vector<32x16xf32>
    %cst_6 = arith.constant 0.000000e+00 : f32
    %11 = vector.broadcast %cst_6 : f32 to vector<32x16xf32>
    %12 = arith.maximumf %10, %11 : vector<32x16xf32>
    %13 = arith.truncf %12 : vector<32x16xf32> to vector<32x16xbf16>
    %c0_7 = arith.constant 0 : index
    %c0_8 = arith.constant 0 : index
    %14 = vector.load %arg4[%c0_7, %c0_8] : memref<16x32xbf16, #tpu.memory_space<vmem>>, vector<16x32xbf16>
    %cst_9 = arith.constant dense<0.000000e+00> : vector<32x32xf32>
    %15 = tpu.matmul %13, %14, %cst_9 {dimension_numbers = #tpu.dot_dimension_numbers<[1], [0], [0], [1], [0, 0, 1, 1], [], []>} : vector<32x16xbf16>, vector<16x32xbf16>, vector<32x32xf32> -> vector<32x32xf32>
    %c0_10 = arith.constant 0 : index
    %c0_11 = arith.constant 0 : index
    %16 = vector.load %arg5[%c0_10, %c0_11] : memref<32x32xf32, #tpu.memory_space<vmem>>, vector<32x32xf32>
    %17 = arith.addf %15, %16 : vector<32x32xf32>
    %c0_12 = arith.constant 0 : index
    %c0_13 = arith.constant 0 : index
    %18 = vector.load %arg6[%c0_12, %c0_13] : memref<32x32xf32, #tpu.memory_space<vmem>>, vector<32x32xf32>
    tpu.vector_store %arg6[%c0_12, %c0_13], %17 {strides = array<i32>} : memref<32x32xf32, #tpu.memory_space<vmem>>, vector<32x32xf32>,
    return
  }
  func.func @transform_0(%arg0: i32) -> (i32, i32, i32) {
    %c0_i32 = arith.constant 0 : i32
    %c0_i32_0 = arith.constant 0 : i32
    %c0_i32_1 = arith.constant 0 : i32
    return %c0_i32, %arg0, %c0_i32_0 : i32, i32, i32
  }
  func.func @transform_1(%arg0: i32) -> (i32, i32) {
    %c0_i32 = arith.constant 0 : i32
    %c0_i32_0 = arith.constant 0 : i32
    %c0_i32_1 = arith.constant 0 : i32
    return %c0_i32, %c0_i32_0 : i32, i32
  }
  func.func @transform_2(%arg0: i32) -> (i32, i32) {
    %c0_i32 = arith.constant 0 : i32
    %c0_i32_0 = arith.constant 0 : i32
    %c0_i32_1 = arith.constant 0 : i32
    return %c0_i32, %c0_i32_0 : i32, i32
  }
  func.func @transform_3(%arg0: i32) -> (i32, i32) {
    %c0_i32 = arith.constant 0 : i32
    %c0_i32_0 = arith.constant 0 : i32
    %c0_i32_1 = arith.constant 0 : i32
    return %c0_i32, %c0_i32_0 : i32, i32
  }
  func.func @transform_4(%arg0: i32) -> (i32, i32) {
    %c0_i32 = arith.constant 0 : i32
    %c0_i32_0 = arith.constant 0 : i32
    return %arg0, %c0_i32 : i32, i32
  }
  func.func @transform_5(%arg0: i32) -> (i32, i32) {
    %c0_i32 = arith.constant 0 : i32
    %c0_i32_0 = arith.constant 0 : i32
    return %arg0, %c0_i32 : i32, i32
  }
}

module attributes {stable_mosaic.version = 11 : i64} {
  func.func @_conv_stats_kernel(%arg0: i32, %arg1: i32, %arg2: memref<4x32x72xbf16, #tpu.memory_space<vmem>>, %arg3: memref<72x16xbf16, #tpu.memory_space<vmem>>, %arg4: memref<4x32x16xbf16, #tpu.memory_space<vmem>>, %arg5: memref<1x1x16xf32, #tpu.memory_space<vmem>>, %arg6: memref<1x1x16xf32, #tpu.memory_space<vmem>>) attributes {dimension_semantics = [#tpu.dimension_semantics<parallel>, #tpu.dimension_semantics<arbitrary>], iteration_bounds = array<i64: 1, 1>, scalar_prefetch = 0 : i64, scratch_operands = 0 : i64, tpu.core_type = #tpu.core_type<tc>, window_params = [{transform_indices = @transform_0, window_bounds = array<i64: 4, 32, 72>}, {pipeline_mode = #tpu.pipeline_mode<synchronous>, transform_indices = @transform_1, window_bounds = array<i64: 72, 16>}, {transform_indices = @transform_2, window_bounds = array<i64: 4, 32, 16>}, {transform_indices = @transform_3, window_bounds = array<i64: 1, 1, 16>}, {transform_indices = @transform_4, window_bounds = array<i64: 1, 1, 16>}]} {
    %c0_i32 = arith.constant 0 : i32
    %0 = arith.cmpi eq, %arg1, %c0_i32 : i32
    %1 = arith.extui %0 : i1 to i32
    %c0_i32_0 = arith.constant 0 : i32
    %2 = arith.cmpi ne, %1, %c0_i32_0 : i32
    scf.if %2 {
      %cst_22 = arith.constant 0.000000e+00 : f32
      %21 = vector.broadcast %cst_22 : f32 to vector<1x1x16xf32>
      %c0_23 = arith.constant 0 : index
      %c0_24 = arith.constant 0 : index
      %c0_25 = arith.constant 0 : index
      %22 = vector.load %arg5[%c0_23, %c0_24, %c0_25] : memref<1x1x16xf32, #tpu.memory_space<vmem>>, vector<1x1x16xf32>
      tpu.vector_store %arg5[%c0_23, %c0_24, %c0_25], %21 {strides = array<i32>} : memref<1x1x16xf32, #tpu.memory_space<vmem>>, vector<1x1x16xf32>,
      %cst_26 = arith.constant 0.000000e+00 : f32
      %23 = vector.broadcast %cst_26 : f32 to vector<1x1x16xf32>
      %c0_27 = arith.constant 0 : index
      %c0_28 = arith.constant 0 : index
      %c0_29 = arith.constant 0 : index
      %24 = vector.load %arg6[%c0_27, %c0_28, %c0_29] : memref<1x1x16xf32, #tpu.memory_space<vmem>>, vector<1x1x16xf32>
      tpu.vector_store %arg6[%c0_27, %c0_28, %c0_29], %23 {strides = array<i32>} : memref<1x1x16xf32, #tpu.memory_space<vmem>>, vector<1x1x16xf32>,
    } else {
    }
    %c0 = arith.constant 0 : index
    %c0_1 = arith.constant 0 : index
    %c0_2 = arith.constant 0 : index
    %3 = vector.load %arg2[%c0, %c0_1, %c0_2] : memref<4x32x72xbf16, #tpu.memory_space<vmem>>, vector<4x32x72xbf16>
    %4 = vector.shape_cast %3 : vector<4x32x72xbf16> to vector<128x72xbf16>
    %c0_3 = arith.constant 0 : index
    %c0_4 = arith.constant 0 : index
    %5 = vector.load %arg3[%c0_3, %c0_4] : memref<72x16xbf16, #tpu.memory_space<vmem>>, vector<72x16xbf16>
    %cst = arith.constant dense<0.000000e+00> : vector<128x16xf32>
    %6 = tpu.matmul %4, %5, %cst {dimension_numbers = #tpu.dot_dimension_numbers<[1], [0], [0], [1], [0, 0, 1, 1], [], []>} : vector<128x72xbf16>, vector<72x16xbf16>, vector<128x16xf32> -> vector<128x16xf32>
    %c0_5 = arith.constant 0 : index
    %c0_6 = arith.constant 0 : index
    %c0_7 = arith.constant 0 : index
    %7 = vector.load %arg5[%c0_5, %c0_6, %c0_7] : memref<1x1x16xf32, #tpu.memory_space<vmem>>, vector<1x1x16xf32>
    %cst_8 = arith.constant dense<0.000000e+00> : vector<16xf32>
    %8 = vector.multi_reduction <add>, %6, %cst_8 [0] : vector<128x16xf32> to vector<16xf32>
    %9 = vector.shape_cast %8 : vector<16xf32> to vector<1x1x16xf32>
    %10 = arith.addf %7, %9 : vector<1x1x16xf32>
    %c0_9 = arith.constant 0 : index
    %c0_10 = arith.constant 0 : index
    %c0_11 = arith.constant 0 : index
    %11 = vector.load %arg5[%c0_9, %c0_10, %c0_11] : memref<1x1x16xf32, #tpu.memory_space<vmem>>, vector<1x1x16xf32>
    tpu.vector_store %arg5[%c0_9, %c0_10, %c0_11], %10 {strides = array<i32>} : memref<1x1x16xf32, #tpu.memory_space<vmem>>, vector<1x1x16xf32>,
    %c0_12 = arith.constant 0 : index
    %c0_13 = arith.constant 0 : index
    %c0_14 = arith.constant 0 : index
    %12 = vector.load %arg6[%c0_12, %c0_13, %c0_14] : memref<1x1x16xf32, #tpu.memory_space<vmem>>, vector<1x1x16xf32>
    %13 = arith.mulf %6, %6 : vector<128x16xf32>
    %cst_15 = arith.constant dense<0.000000e+00> : vector<16xf32>
    %14 = vector.multi_reduction <add>, %13, %cst_15 [0] : vector<128x16xf32> to vector<16xf32>
    %15 = vector.shape_cast %14 : vector<16xf32> to vector<1x1x16xf32>
    %16 = arith.addf %12, %15 : vector<1x1x16xf32>
    %c0_16 = arith.constant 0 : index
    %c0_17 = arith.constant 0 : index
    %c0_18 = arith.constant 0 : index
    %17 = vector.load %arg6[%c0_16, %c0_17, %c0_18] : memref<1x1x16xf32, #tpu.memory_space<vmem>>, vector<1x1x16xf32>
    tpu.vector_store %arg6[%c0_16, %c0_17, %c0_18], %16 {strides = array<i32>} : memref<1x1x16xf32, #tpu.memory_space<vmem>>, vector<1x1x16xf32>,
    %18 = vector.shape_cast %6 : vector<128x16xf32> to vector<4x32x16xf32>
    %19 = arith.truncf %18 : vector<4x32x16xf32> to vector<4x32x16xbf16>
    %c0_19 = arith.constant 0 : index
    %c0_20 = arith.constant 0 : index
    %c0_21 = arith.constant 0 : index
    %20 = vector.load %arg4[%c0_19, %c0_20, %c0_21] : memref<4x32x16xbf16, #tpu.memory_space<vmem>>, vector<4x32x16xbf16>
    tpu.vector_store %arg4[%c0_19, %c0_20, %c0_21], %19 {strides = array<i32>} : memref<4x32x16xbf16, #tpu.memory_space<vmem>>, vector<4x32x16xbf16>,
    return
  }
  func.func @transform_0(%arg0: i32, %arg1: i32) -> (i32, i32, i32) {
    %c1_i32 = arith.constant 1 : i32
    %0 = arith.muli %arg0, %c1_i32 : i32
    %1 = arith.addi %0, %arg1 : i32
    %c0_i32 = arith.constant 0 : i32
    %c0_i32_0 = arith.constant 0 : i32
    %c0_i32_1 = arith.constant 0 : i32
    return %c0_i32, %1, %c0_i32_0 : i32, i32, i32
  }
  func.func @transform_1(%arg0: i32, %arg1: i32) -> (i32, i32) {
    %c0_i32 = arith.constant 0 : i32
    %c0_i32_0 = arith.constant 0 : i32
    %c0_i32_1 = arith.constant 0 : i32
    return %c0_i32, %c0_i32_0 : i32, i32
  }
  func.func @transform_2(%arg0: i32, %arg1: i32) -> (i32, i32, i32) {
    %c1_i32 = arith.constant 1 : i32
    %0 = arith.muli %arg0, %c1_i32 : i32
    %1 = arith.addi %0, %arg1 : i32
    %c0_i32 = arith.constant 0 : i32
    %c0_i32_0 = arith.constant 0 : i32
    %c0_i32_1 = arith.constant 0 : i32
    return %c0_i32, %1, %c0_i32_0 : i32, i32, i32
  }
  func.func @transform_3(%arg0: i32, %arg1: i32) -> (i32, i32, i32) {
    %c0_i32 = arith.constant 0 : i32
    %c0_i32_0 = arith.constant 0 : i32
    %c0_i32_1 = arith.constant 0 : i32
    return %arg0, %c0_i32, %c0_i32_0 : i32, i32, i32
  }
  func.func @transform_4(%arg0: i32, %arg1: i32) -> (i32, i32, i32) {
    %c0_i32 = arith.constant 0 : i32
    %c0_i32_0 = arith.constant 0 : i32
    %c0_i32_1 = arith.constant 0 : i32
    return %arg0, %c0_i32, %c0_i32_0 : i32, i32, i32
  }
}

</mosaic_0001>

<llo_original>
// kernel: memory_encoder_forward.5
$region0: #{memory_encoder_forward.5}
  #allocation0 [shape = 'u32[]', space=smem, size = 0x4, offset = 0x4, fixed_abs, tag = 'smem constant byte address 0x4 - core index']
  #allocation1 [shape = 'u32[144,128]{1,0:T(1,128)}', space=vmem, size = 0x12000, scoped, tag = 'internal scratch']
  %s0 = inlined_call_operand.vmem [shape: bf16[4,128,8], index: 0, kind: input, shape index: {}]
  %s1 = inlined_call_operand.vmem [shape: f32[1,8], index: 1, kind: input, shape index: {}]
  %s2 = inlined_call_operand.vmem [shape: f32[1,8], index: 2, kind: input, shape index: {}]
  %s3 = inlined_call_operand.vmem [shape: bf16[128,8], index: 3, kind: output, shape index: {}]
  %s4 = sld [smem:[#allocation0]]
  $region22: #{memory_encoder_forward.5} parent=0
    _
  %s6 = ssub.s32 1, %s4
  %s7 = scalar_select 0, %s6, %s4
  // Predicated region
  $region2: #{memory_encoder_forward.5} parent=0 // pred_check
    _
  $region3: #{memory_encoder_forward.5} parent=0 // pred_check_branch
    %9 = sbr.rel (0) target = $region5
  $region4: #{memory_encoder_forward.5} parent=0 // pred_region
    _
  $region5: #{memory_encoder_forward.5} parent=0 // pred_fallthru
    _
  // Predicated region
  $region6: #{memory_encoder_forward.5} parent=0 // pred_check
    _
  $region7: #{memory_encoder_forward.5} parent=0 // pred_check_branch
    %11 = sbr.rel (0) target = $region9
  $region8: #{memory_encoder_forward.5} parent=0 // pred_region
    _
  $region9: #{memory_encoder_forward.5} parent=0 // pred_fallthru
    _
  // Predicated region
  $region10: #{memory_encoder_forward.5} parent=0 // pred_check
    _
  $region11: #{memory_encoder_forward.5} parent=0 // pred_check_branch
    %13 = sbr.rel (0) target = $region13
  $region12: #{memory_encoder_forward.5} parent=0 // pred_region
    _
  $region13: #{memory_encoder_forward.5} parent=0 // pred_fallthru
    _
  %v14 = vld [vmem:[%s0] sm:$0xf]
  %v15 = vld [vmem:[%s0 + $0x4] sm:$0xf]
  %v16 = vld [vmem:[%s0 + $0x8] sm:$0xf]
  %v17 = vld [vmem:[%s0 + $0xc] sm:$0xf]
  %v18 = vld [vmem:[%s0 + $0x10] sm:$0xf]
  %v19 = vld [vmem:[%s0 + $0x14] sm:$0xf]
  %v20 = vld [vmem:[%s0 + $0x18] sm:$0xf]
  %v21 = vld [vmem:[%s0 + $0x1c] sm:$0xf]
  %v22 = vld [vmem:[%s0 + $0x20] sm:$0xf]
  %v23 = vld [vmem:[%s0 + $0x24] sm:$0xf]
  %v24 = vld [vmem:[%s0 + $0x28] sm:$0xf]
  %v25 = vld [vmem:[%s0 + $0x2c] sm:$0xf]
  %v26 = vld [vmem:[%s0 + $0x30] sm:$0xf]
  %v27 = vld [vmem:[%s0 + $0x34] sm:$0xf]
  %v28 = vld [vmem:[%s0 + $0x38] sm:$0xf]
  %v29 = vld [vmem:[%s0 + $0x3c] sm:$0xf]
  %v30 = vld [vmem:[%s0 + $0x40] sm:$0xf]
  %v31 = vld [vmem:[%s0 + $0x44] sm:$0xf]
  %v32 = vld [vmem:[%s0 + $0x48] sm:$0xf]
  %v33 = vld [vmem:[%s0 + $0x4c] sm:$0xf]
  %v34 = vld [vmem:[%s0 + $0x50] sm:$0xf]
  %v35 = vld [vmem:[%s0 + $0x54] sm:$0xf]
  %v36 = vld [vmem:[%s0 + $0x58] sm:$0xf]
  %v37 = vld [vmem:[%s0 + $0x5c] sm:$0xf]
  %v38 = vld [vmem:[%s0 + $0x60] sm:$0xf]
  %v39 = vld [vmem:[%s0 + $0x64] sm:$0xf]
  %v40 = vld [vmem:[%s0 + $0x68] sm:$0xf]
  %v41 = vld [vmem:[%s0 + $0x6c] sm:$0xf]
  %v42 = vld [vmem:[%s0 + $0x70] sm:$0xf]
  %v43 = vld [vmem:[%s0 + $0x74] sm:$0xf]
  %v44 = vld [vmem:[%s0 + $0x78] sm:$0xf]
  %v45 = vld [vmem:[%s0 + $0x7c] sm:$0xf]
  %v46 = vld [vmem:[%s0 + $0x80] sm:$0xf]
  %v47 = vld [vmem:[%s0 + $0x84] sm:$0xf]
  %v48 = vld [vmem:[%s0 + $0x88] sm:$0xf]
  %v49 = vld [vmem:[%s0 + $0x8c] sm:$0xf]
  %v50 = vld [vmem:[%s0 + $0x90] sm:$0xf]
  %v51 = vld [vmem:[%s0 + $0x94] sm:$0xf]
  %v52 = vld [vmem:[%s0 + $0x98] sm:$0xf]
  %v53 = vld [vmem:[%s0 + $0x9c] sm:$0xf]
  %v54 = vld [vmem:[%s0 + $0xa0] sm:$0xf]
  %v55 = vld [vmem:[%s0 + $0xa4] sm:$0xf]
  %v56 = vld [vmem:[%s0 + $0xa8] sm:$0xf]
  %v57 = vld [vmem:[%s0 + $0xac] sm:$0xf]
  %v58 = vld [vmem:[%s0 + $0xb0] sm:$0xf]
  %v59 = vld [vmem:[%s0 + $0xb4] sm:$0xf]
  %v60 = vld [vmem:[%s0 + $0xb8] sm:$0xf]
  %v61 = vld [vmem:[%s0 + $0xbc] sm:$0xf]
  %v62 = vld [vmem:[%s0 + $0xc0] sm:$0xf]
  %v63 = vld [vmem:[%s0 + $0xc4] sm:$0xf]
  %v64 = vld [vmem:[%s0 + $0xc8] sm:$0xf]
  %v65 = vld [vmem:[%s0 + $0xcc] sm:$0xf]
  %v66 = vld [vmem:[%s0 + $0xd0] sm:$0xf]
  %v67 = vld [vmem:[%s0 + $0xd4] sm:$0xf]
  %v68 = vld [vmem:[%s0 + $0xd8] sm:$0xf]
  %v69 = vld [vmem:[%s0 + $0xdc] sm:$0xf]
  %v70 = vld [vmem:[%s0 + $0xe0] sm:$0xf]
  %v71 = vld [vmem:[%s0 + $0xe4] sm:$0xf]
  %v72 = vld [vmem:[%s0 + $0xe8] sm:$0xf]
  %v73 = vld [vmem:[%s0 + $0xec] sm:$0xf]
  %v74 = vld [vmem:[%s0 + $0xf0] sm:$0xf]
  %v75 = vld [vmem:[%s0 + $0xf4] sm:$0xf]
  %v76 = vld [vmem:[%s0 + $0xf8] sm:$0xf]
  %v77 = vld [vmem:[%s0 + $0xfc] sm:$0xf]
  %v78 = vunpack.c.l.bf16 %v14
  %v79 = vunpack.c.l.bf16 %v15
  %v80 = vunpack.c.l.bf16 %v16
  %v81 = vunpack.c.l.bf16 %v17
  %v82 = vunpack.c.l.bf16 %v18
  %v83 = vunpack.c.l.bf16 %v19
  %v84 = vunpack.c.l.bf16 %v20
  %v85 = vunpack.c.l.bf16 %v21
  %v86 = vunpack.c.l.bf16 %v22
  %v87 = vunpack.c.l.bf16 %v23
  %v88 = vunpack.c.l.bf16 %v24
  %v89 = vunpack.c.l.bf16 %v25
  %v90 = vunpack.c.l.bf16 %v26
  %v91 = vunpack.c.l.bf16 %v27
  %v92 = vunpack.c.l.bf16 %v28
  %v93 = vunpack.c.l.bf16 %v29
  %v94 = vunpack.c.l.bf16 %v30
  %v95 = vunpack.c.l.bf16 %v31
  %v96 = vunpack.c.l.bf16 %v32
  %v97 = vunpack.c.l.bf16 %v33
  %v98 = vunpack.c.l.bf16 %v34
  %v99 = vunpack.c.l.bf16 %v35
  %v100 = vunpack.c.l.bf16 %v36
  %v101 = vunpack.c.l.bf16 %v37
  %v102 = vunpack.c.l.bf16 %v38
  %v103 = vunpack.c.l.bf16 %v39
  %v104 = vunpack.c.l.bf16 %v40
  %v105 = vunpack.c.l.bf16 %v41
  %v106 = vunpack.c.l.bf16 %v42
  %v107 = vunpack.c.l.bf16 %v43
  %v108 = vunpack.c.l.bf16 %v44
  %v109 = vunpack.c.l.bf16 %v45
  %v110 = vunpack.c.l.bf16 %v46
  %v111 = vunpack.c.l.bf16 %v47
  %v112 = vunpack.c.l.bf16 %v48
  %v113 = vunpack.c.l.bf16 %v49
  %v114 = vunpack.c.l.bf16 %v50
  %v115 = vunpack.c.l.bf16 %v51
  %v116 = vunpack.c.l.bf16 %v52
  %v117 = vunpack.c.l.bf16 %v53
  %v118 = vunpack.c.l.bf16 %v54
  %v119 = vunpack.c.l.bf16 %v55
  %v120 = vunpack.c.l.bf16 %v56
  %v121 = vunpack.c.l.bf16 %v57
  %v122 = vunpack.c.l.bf16 %v58
  %v123 = vunpack.c.l.bf16 %v59
  %v124 = vunpack.c.l.bf16 %v60
  %v125 = vunpack.c.l.bf16 %v61
  %v126 = vunpack.c.l.bf16 %v62
  %v127 = vunpack.c.l.bf16 %v63
  %v128 = vunpack.c.l.bf16 %v64
  %v129 = vunpack.c.l.bf16 %v65
  %v130 = vunpack.c.l.bf16 %v66
  %v131 = vunpack.c.l.bf16 %v67
  %v132 = vunpack.c.l.bf16 %v68
  %v133 = vunpack.c.l.bf16 %v69
  %v134 = vunpack.c.l.bf16 %v70
  %v135 = vunpack.c.l.bf16 %v71
  %v136 = vunpack.c.l.bf16 %v72
  %v137 = vunpack.c.l.bf16 %v73
  %v138 = vunpack.c.l.bf16 %v74
  %v139 = vunpack.c.l.bf16 %v75
  %v140 = vunpack.c.l.bf16 %v76
  %v141 = vunpack.c.l.bf16 %v77
  %v142 = vld [vmem:[%s1] sm:$0x1]
  %v144 = vlaneseq
  %v145 = vshrl.u32 %v144, 7
  %v146 = vsub.s32 0, %v145
  %v147 = vrot.slane %v142, %v146
  %v149 = vmul.f32 %v78, %v147
  %v150 = vmul.f32 %v79, %v147
  %v151 = vmul.f32 %v80, %v147
  %v152 = vmul.f32 %v81, %v147
  %v153 = vmul.f32 %v82, %v147
  %v154 = vmul.f32 %v83, %v147
  %v155 = vmul.f32 %v84, %v147
  %v156 = vmul.f32 %v85, %v147
  %v157 = vmul.f32 %v86, %v147
  %v158 = vmul.f32 %v87, %v147
  %v159 = vmul.f32 %v88, %v147
  %v160 = vmul.f32 %v89, %v147
  %v161 = vmul.f32 %v90, %v147
  %v162 = vmul.f32 %v91, %v147
  %v163 = vmul.f32 %v92, %v147
  %v164 = vmul.f32 %v93, %v147
  %v165 = vmul.f32 %v94, %v147
  %v166 = vmul.f32 %v95, %v147
  %v167 = vmul.f32 %v96, %v147
  %v168 = vmul.f32 %v97, %v147
  %v169 = vmul.f32 %v98, %v147
  %v170 = vmul.f32 %v99, %v147
  %v171 = vmul.f32 %v100, %v147
  %v172 = vmul.f32 %v101, %v147
  %v173 = vmul.f32 %v102, %v147
  %v174 = vmul.f32 %v103, %v147
  %v175 = vmul.f32 %v104, %v147
  %v176 = vmul.f32 %v105, %v147
  %v177 = vmul.f32 %v106, %v147
  %v178 = vmul.f32 %v107, %v147
  %v179 = vmul.f32 %v108, %v147
  %v180 = vmul.f32 %v109, %v147
  %v181 = vmul.f32 %v110, %v147
  %v182 = vmul.f32 %v111, %v147
  %v183 = vmul.f32 %v112, %v147
  %v184 = vmul.f32 %v113, %v147
  %v185 = vmul.f32 %v114, %v147
  %v186 = vmul.f32 %v115, %v147
  %v187 = vmul.f32 %v116, %v147
  %v188 = vmul.f32 %v117, %v147
  %v189 = vmul.f32 %v118, %v147
  %v190 = vmul.f32 %v119, %v147
  %v191 = vmul.f32 %v120, %v147
  %v192 = vmul.f32 %v121, %v147
  %v193 = vmul.f32 %v122, %v147
  %v194 = vmul.f32 %v123, %v147
  %v195 = vmul.f32 %v124, %v147
  %v196 = vmul.f32 %v125, %v147
  %v197 = vmul.f32 %v126, %v147
  %v198 = vmul.f32 %v127, %v147
  %v199 = vmul.f32 %v128, %v147
  %v200 = vmul.f32 %v129, %v147
  %v201 = vmul.f32 %v130, %v147
  %v202 = vmul.f32 %v131, %v147
  %v203 = vmul.f32 %v132, %v147
  %v204 = vmul.f32 %v133, %v147
  %v205 = vmul.f32 %v134, %v147
  %v206 = vmul.f32 %v135, %v147
  %v207 = vmul.f32 %v136, %v147
  %v208 = vmul.f32 %v137, %v147
  %v209 = vmul.f32 %v138, %v147
  %v210 = vmul.f32 %v139, %v147
  %v211 = vmul.f32 %v140, %v147
  %v212 = vmul.f32 %v141, %v147
  %v213 = vld [vmem:[%s2] sm:$0x1]
  %v215 = vlaneseq
  %v216 = vshrl.u32 %v215, 7
  %v217 = vsub.s32 0, %v216
  %v218 = vrot.slane %v213, %v217
  %v220 = vadd.f32 %v149, %v218
  %v221 = vadd.f32 %v150, %v218
  %v222 = vadd.f32 %v151, %v218
  %v223 = vadd.f32 %v152, %v218
  %v224 = vadd.f32 %v153, %v218
  %v225 = vadd.f32 %v154, %v218
  %v226 = vadd.f32 %v155, %v218
  %v227 = vadd.f32 %v156, %v218
  %v228 = vadd.f32 %v157, %v218
  %v229 = vadd.f32 %v158, %v218
  %v230 = vadd.f32 %v159, %v218
  %v231 = vadd.f32 %v160, %v218
  %v232 = vadd.f32 %v161, %v218
  %v233 = vadd.f32 %v162, %v218
  %v234 = vadd.f32 %v163, %v218
  %v235 = vadd.f32 %v164, %v218
  %v236 = vadd.f32 %v165, %v218
  %v237 = vadd.f32 %v166, %v218
  %v238 = vadd.f32 %v167, %v218
  %v239 = vadd.f32 %v168, %v218
  %v240 = vadd.f32 %v169, %v218
  %v241 = vadd.f32 %v170, %v218
  %v242 = vadd.f32 %v171, %v218
  %v243 = vadd.f32 %v172, %v218
  %v244 = vadd.f32 %v173, %v218
  %v245 = vadd.f32 %v174, %v218
  %v246 = vadd.f32 %v175, %v218
  %v247 = vadd.f32 %v176, %v218
  %v248 = vadd.f32 %v177, %v218
  %v249 = vadd.f32 %v178, %v218
  %v250 = vadd.f32 %v179, %v218
  %v251 = vadd.f32 %v180, %v218
  %v252 = vadd.f32 %v181, %v218
  %v253 = vadd.f32 %v182, %v218
  %v254 = vadd.f32 %v183, %v218
  %v255 = vadd.f32 %v184, %v218
  %v256 = vadd.f32 %v185, %v218
  %v257 = vadd.f32 %v186, %v218
  %v258 = vadd.f32 %v187, %v218
  %v259 = vadd.f32 %v188, %v218
  %v260 = vadd.f32 %v189, %v218
  %v261 = vadd.f32 %v190, %v218
  %v262 = vadd.f32 %v191, %v218
  %v263 = vadd.f32 %v192, %v218
  %v264 = vadd.f32 %v193, %v218
  %v265 = vadd.f32 %v194, %v218
  %v266 = vadd.f32 %v195, %v218
  %v267 = vadd.f32 %v196, %v218
  %v268 = vadd.f32 %v197, %v218
  %v269 = vadd.f32 %v198, %v218
  %v270 = vadd.f32 %v199, %v218
  %v271 = vadd.f32 %v200, %v218
  %v272 = vadd.f32 %v201, %v218
  %v273 = vadd.f32 %v202, %v218
  %v274 = vadd.f32 %v203, %v218
  %v275 = vadd.f32 %v204, %v218
  %v276 = vadd.f32 %v205, %v218
  %v277 = vadd.f32 %v206, %v218
  %v278 = vadd.f32 %v207, %v218
  %v279 = vadd.f32 %v208, %v218
  %v280 = vadd.f32 %v209, %v218
  %v281 = vadd.f32 %v210, %v218
  %v282 = vadd.f32 %v211, %v218
  %v283 = vadd.f32 %v212, %v218
  %vm284 = vcmask 64512
  %v285 = vsel %vm284, %v220, -inf
  %v286 = vsel %vm284, %v236, -inf
  %v287 = vmax.f32 %v285, %v286
  %v288 = vsel %vm284, %v252, -inf
  %v289 = vmax.f32 %v287, %v288
  %v290 = vsel %vm284, %v268, -inf
  %v291 = vmax.f32 %v289, %v290
  %v292 = vsel %vm284, %v221, -inf
  %v293 = vsel %vm284, %v237, -inf
  %v294 = vmax.f32 %v292, %v293
  %v295 = vsel %vm284, %v253, -inf
  %v296 = vmax.f32 %v294, %v295
  %v297 = vsel %vm284, %v269, -inf
  %v298 = vmax.f32 %v296, %v297
  %v299 = vsel %vm284, %v222, -inf
  %v300 = vsel %vm284, %v238, -inf
  %v301 = vmax.f32 %v299, %v300
  %v302 = vsel %vm284, %v254, -inf
  %v303 = vmax.f32 %v301, %v302
  %v304 = vsel %vm284, %v270, -inf
  %v305 = vmax.f32 %v303, %v304
  %v306 = vsel %vm284, %v223, -inf
  %v307 = vsel %vm284, %v239, -inf
  %v308 = vmax.f32 %v306, %v307
  %v309 = vsel %vm284, %v255, -inf
  %v310 = vmax.f32 %v308, %v309
  %v311 = vsel %vm284, %v271, -inf
  %v312 = vmax.f32 %v310, %v311
  %v313 = vsel %vm284, %v224, -inf
  %v314 = vsel %vm284, %v240, -inf
  %v315 = vmax.f32 %v313, %v314
  %v316 = vsel %vm284, %v256, -inf
  %v317 = vmax.f32 %v315, %v316
  %v318 = vsel %vm284, %v272, -inf
  %v319 = vmax.f32 %v317, %v318
  %v320 = vsel %vm284, %v225, -inf
  %v321 = vsel %vm284, %v241, -inf
  %v322 = vmax.f32 %v320, %v321
  %v323 = vsel %vm284, %v257, -inf
  %v324 = vmax.f32 %v322, %v323
  %v325 = vsel %vm284, %v273, -inf
  %v326 = vmax.f32 %v324, %v325
  %v327 = vsel %vm284, %v226, -inf
  %v328 = vsel %vm284, %v242, -inf
  %v329 = vmax.f32 %v327, %v328
  %v330 = vsel %vm284, %v258, -inf
  %v331 = vmax.f32 %v329, %v330
  %v332 = vsel %vm284, %v274, -inf
  %v333 = vmax.f32 %v331, %v332
  %v334 = vsel %vm284, %v227, -inf
  %v335 = vsel %vm284, %v243, -inf
  %v336 = vmax.f32 %v334, %v335
  %v337 = vsel %vm284, %v259, -inf
  %v338 = vmax.f32 %v336, %v337
  %v339 = vsel %vm284, %v275, -inf
  %v340 = vmax.f32 %v338, %v339
  %v341 = vsel %vm284, %v228, -inf
  %v342 = vsel %vm284, %v244, -inf
  %v343 = vmax.f32 %v341, %v342
  %v344 = vsel %vm284, %v260, -inf
  %v345 = vmax.f32 %v343, %v344
  %v346 = vsel %vm284, %v276, -inf
  %v347 = vmax.f32 %v345, %v346
  %v348 = vsel %vm284, %v229, -inf
  %v349 = vsel %vm284, %v245, -inf
  %v350 = vmax.f32 %v348, %v349
  %v351 = vsel %vm284, %v261, -inf
  %v352 = vmax.f32 %v350, %v351
  %v353 = vsel %vm284, %v277, -inf
  %v354 = vmax.f32 %v352, %v353
  %v355 = vsel %vm284, %v230, -inf
  %v356 = vsel %vm284, %v246, -inf
  %v357 = vmax.f32 %v355, %v356
  %v358 = vsel %vm284, %v262, -inf
  %v359 = vmax.f32 %v357, %v358
  %v360 = vsel %vm284, %v278, -inf
  %v361 = vmax.f32 %v359, %v360
  %v362 = vsel %vm284, %v231, -inf
  %v363 = vsel %vm284, %v247, -inf
  %v364 = vmax.f32 %v362, %v363
  %v365 = vsel %vm284, %v263, -inf
  %v366 = vmax.f32 %v364, %v365
  %v367 = vsel %vm284, %v279, -inf
  %v368 = vmax.f32 %v366, %v367
  %v369 = vsel %vm284, %v232, -inf
  %v370 = vsel %vm284, %v248, -inf
  %v371 = vmax.f32 %v369, %v370
  %v372 = vsel %vm284, %v264, -inf
  %v373 = vmax.f32 %v371, %v372
  %v374 = vsel %vm284, %v280, -inf
  %v375 = vmax.f32 %v373, %v374
  %v376 = vsel %vm284, %v233, -inf
  %v377 = vsel %vm284, %v249, -inf
  %v378 = vmax.f32 %v376, %v377
  %v379 = vsel %vm284, %v265, -inf
  %v380 = vmax.f32 %v378, %v379
  %v381 = vsel %vm284, %v281, -inf
  %v382 = vmax.f32 %v380, %v381
  %v383 = vsel %vm284, %v234, -inf
  %v384 = vsel %vm284, %v250, -inf
  %v385 = vmax.f32 %v383, %v384
  %v386 = vsel %vm284, %v266, -inf
  %v387 = vmax.f32 %v385, %v386
  %v388 = vsel %vm284, %v282, -inf
  %v389 = vmax.f32 %v387, %v388
  %v390 = vsel %vm284, %v235, -inf
  %v391 = vsel %vm284, %v251, -inf
  %v392 = vmax.f32 %v390, %v391
  %v393 = vsel %vm284, %v267, -inf
  %v394 = vmax.f32 %v392, %v393
  %v395 = vsel %vm284, %v283, -inf
  %v396 = vmax.f32 %v394, %v395
  %v397 = vmax.f32 %v291, 0.0
  %v398 = vmax.f32 %v298, 0.0
  %v399 = vmax.f32 %v305, 0.0
  %v400 = vmax.f32 %v312, 0.0
  %v401 = vmax.f32 %v319, 0.0
  %v402 = vmax.f32 %v326, 0.0
  %v403 = vmax.f32 %v333, 0.0
  %v404 = vmax.f32 %v340, 0.0
  %v405 = vmax.f32 %v347, 0.0
  %v406 = vmax.f32 %v354, 0.0
  %v407 = vmax.f32 %v361, 0.0
  %v408 = vmax.f32 %v368, 0.0
  %v409 = vmax.f32 %v375, 0.0
  %v410 = vmax.f32 %v382, 0.0
  %v411 = vmax.f32 %v389, 0.0
  %v412 = vmax.f32 %v396, 0.0
  %v413 = vpack.c.bf16 %v398, %v397
  %v414 = vpack.c.bf16 %v400, %v399
  %v415 = vpack.c.bf16 %v402, %v401
  %v416 = vpack.c.bf16 %v404, %v403
  %v417 = vpack.c.bf16 %v406, %v405
  %v418 = vpack.c.bf16 %v408, %v407
  %v419 = vpack.c.bf16 %v410, %v409
  %v420 = vpack.c.bf16 %v412, %v411
  %v429 = vunpack.c.l.b16 %v413
  %v430 = vunpack.c.h.b16 %v413
  %v431 = vunpack.c.l.b16 %v414
  %v432 = vunpack.c.h.b16 %v414
  %v433 = vunpack.c.l.b16 %v415
  %v434 = vunpack.c.h.b16 %v415
  %v435 = vunpack.c.l.b16 %v416
  %v436 = vunpack.c.h.b16 %v416
  %v437 = vunpack.c.l.b16 %v417
  %v438 = vunpack.c.h.b16 %v417
  %v439 = vunpack.c.l.b16 %v418
  %v440 = vunpack.c.h.b16 %v418
  %v441 = vunpack.c.l.b16 %v419
  %v442 = vunpack.c.h.b16 %v419
  %v443 = vunpack.c.l.b16 %v420
  %v444 = vunpack.c.h.b16 %v420
  %v445 = vpack.c.b16 %v429, %v429
  %v446 = vpack.c.b16 %v430, %v430
  %v447 = vpack.c.b16 %v431, %v431
  %v448 = vpack.c.b16 %v432, %v432
  %v449 = vpack.c.b16 %v433, %v433
  %v450 = vpack.c.b16 %v434, %v434
  %v451 = vpack.c.b16 %v435, %v435
  %v452 = vpack.c.b16 %v436, %v436
  %v453 = vpack.c.b16 %v437, %v437
  %v454 = vpack.c.b16 %v438, %v438
  %v455 = vpack.c.b16 %v439, %v439
  %v456 = vpack.c.b16 %v440, %v440
  %v457 = vpack.c.b16 %v441, %v441
  %v458 = vpack.c.b16 %v442, %v442
  %v459 = vpack.c.b16 %v443, %v443
  %v460 = vpack.c.b16 %v444, %v444
  %vm477 = vcmask 60416
  %478 = vst.msk [vmem:[%s3] sm:$0xf] %vm477, %v445
  %479 = vst.msk [vmem:[%s3 + $0x4] sm:$0xf] %vm477, %v446
  %480 = vst.msk [vmem:[%s3 + $0x8] sm:$0xf] %vm477, %v447
  %481 = vst.msk [vmem:[%s3 + $0xc] sm:$0xf] %vm477, %v448
  %482 = vst.msk [vmem:[%s3 + $0x10] sm:$0xf] %vm477, %v449
  %483 = vst.msk [vmem:[%s3 + $0x14] sm:$0xf] %vm477, %v450
  %484 = vst.msk [vmem:[%s3 + $0x18] sm:$0xf] %vm477, %v451
  %485 = vst.msk [vmem:[%s3 + $0x1c] sm:$0xf] %vm477, %v452
  %486 = vst.msk [vmem:[%s3 + $0x20] sm:$0xf] %vm477, %v453
  %487 = vst.msk [vmem:[%s3 + $0x24] sm:$0xf] %vm477, %v454
  %488 = vst.msk [vmem:[%s3 + $0x28] sm:$0xf] %vm477, %v455
  %489 = vst.msk [vmem:[%s3 + $0x2c] sm:$0xf] %vm477, %v456
  %490 = vst.msk [vmem:[%s3 + $0x30] sm:$0xf] %vm477, %v457
  %491 = vst.msk [vmem:[%s3 + $0x34] sm:$0xf] %vm477, %v458
  %492 = vst.msk [vmem:[%s3 + $0x38] sm:$0xf] %vm477, %v459
  %493 = vst.msk [vmem:[%s3 + $0x3c] sm:$0xf] %vm477, %v460
  // Predicated region
  $region14: #{memory_encoder_forward.5} parent=0 // pred_check
    _
  $region15: #{memory_encoder_forward.5} parent=0 // pred_check_branch
    %495 = sbr.rel (0) target = $region17
  $region16: #{memory_encoder_forward.5} parent=0 // pred_region
    _
  $region17: #{memory_encoder_forward.5} parent=0 // pred_fallthru
    _
  // Predicated region
  $region18: #{memory_encoder_forward.5} parent=0 // pred_check
    _
  $region19: #{memory_encoder_forward.5} parent=0 // pred_check_branch
    %497 = sbr.rel (0) target = $region21
  $region20: #{memory_encoder_forward.5} parent=0 // pred_region
    _
  $region21: #{memory_encoder_forward.5} parent=0 // pred_fallthru
    _

// kernel: memory_encoder_forward.7
$region0: #{memory_encoder_forward.7}
  #allocation0 [shape = 'u32[]', space=smem, size = 0x4, offset = 0x4, fixed_abs, tag = 'smem constant byte address 0x4 - core index']
  #allocation1 [shape = 'u32[144,128]{1,0:T(1,128)}', space=vmem, size = 0x12000, scoped, tag = 'internal scratch']
  %s0 = inlined_call_operand.vmem [shape: bf16[4,32,16], index: 0, kind: input, shape index: {}]
  %s1 = inlined_call_operand.vmem [shape: f32[1,16], index: 1, kind: input, shape index: {}]
  %s2 = inlined_call_operand.vmem [shape: f32[1,16], index: 2, kind: input, shape index: {}]
  %s3 = inlined_call_operand.vmem [shape: bf16[16,32], index: 3, kind: input, shape index: {}]
  %s4 = inlined_call_operand.vmem [shape: f32[32,32], index: 4, kind: input, shape index: {}, may-alias: {4,5}]
  %s5 = inlined_call_operand.vmem [shape: f32[32,32], index: 5, kind: output, shape index: {}, may-alias: {4,5}]
  %s6 = sld [smem:[#allocation0]]
  $region30: #{memory_encoder_forward.7} parent=0
    _
  %s8 = ssub.s32 1, %s6
  %s9 = scalar_select 0, %s8, %s6
  // Predicated region
  $region2: #{memory_encoder_forward.7} parent=0 // pred_check
    _
  $region3: #{memory_encoder_forward.7} parent=0 // pred_check_branch
    %11 = sbr.rel (0) target = $region5
  $region4: #{memory_encoder_forward.7} parent=0 // pred_region
    _
  $region5: #{memory_encoder_forward.7} parent=0 // pred_fallthru
    _
  // Predicated region
  $region6: #{memory_encoder_forward.7} parent=0 // pred_check
    _
  $region7: #{memory_encoder_forward.7} parent=0 // pred_check_branch
    %13 = sbr.rel (0) target = $region9
  $region8: #{memory_encoder_forward.7} parent=0 // pred_region
    _
  $region9: #{memory_encoder_forward.7} parent=0 // pred_fallthru
    _
  // Predicated region
  $region10: #{memory_encoder_forward.7} parent=0 // pred_check
    _
  $region11: #{memory_encoder_forward.7} parent=0 // pred_check_branch
    %15 = sbr.rel (0) target = $region13
  $region12: #{memory_encoder_forward.7} parent=0 // pred_region
    _
  $region13: #{memory_encoder_forward.7} parent=0 // pred_fallthru
    _
  // Predicated region
  $region14: #{memory_encoder_forward.7} parent=0 // pred_check
    _
  $region15: #{memory_encoder_forward.7} parent=0 // pred_check_branch
    %17 = sbr.rel (0) target = $region17
  $region16: #{memory_encoder_forward.7} parent=0 // pred_region
    _
  $region17: #{memory_encoder_forward.7} parent=0 // pred_fallthru
    _
  // Predicated region
  $region18: #{memory_encoder_forward.7} parent=0 // pred_check
    _
  $region19: #{memory_encoder_forward.7} parent=0 // pred_check_branch
    %19 = sbr.rel (0) target = $region21
  $region20: #{memory_encoder_forward.7} parent=0 // pred_region
    _
  $region21: #{memory_encoder_forward.7} parent=0 // pred_fallthru
    _
  %v21 = vld [vmem:[%s0] sm:$0xf]
  %v22 = vld [vmem:[%s0 + $0x4] sm:$0xf]
  %v23 = vld [vmem:[%s0 + $0x8] sm:$0xf]
  %v24 = vld [vmem:[%s0 + $0xc] sm:$0xf]
  %v25 = vld [vmem:[%s0 + $0x10] sm:$0xf]
  %v26 = vld [vmem:[%s0 + $0x14] sm:$0xf]
  %v27 = vld [vmem:[%s0 + $0x18] sm:$0xf]
  %v28 = vld [vmem:[%s0 + $0x1c] sm:$0xf]
  %v29 = vld [vmem:[%s0 + $0x20] sm:$0xf]
  %v30 = vld [vmem:[%s0 + $0x24] sm:$0xf]
  %v31 = vld [vmem:[%s0 + $0x28] sm:$0xf]
  %v32 = vld [vmem:[%s0 + $0x2c] sm:$0xf]
  %v33 = vld [vmem:[%s0 + $0x30] sm:$0xf]
  %v34 = vld [vmem:[%s0 + $0x34] sm:$0xf]
  %v35 = vld [vmem:[%s0 + $0x38] sm:$0xf]
  %v36 = vld [vmem:[%s0 + $0x3c] sm:$0xf]
  %v37 = vunpack.c.l.bf16 %v21
  %v38 = vunpack.c.l.bf16 %v22
  %v39 = vunpack.c.l.bf16 %v23
  %v40 = vunpack.c.l.bf16 %v24
  %v41 = vunpack.c.l.bf16 %v25
  %v42 = vunpack.c.l.bf16 %v26
  %v43 = vunpack.c.l.bf16 %v27
  %v44 = vunpack.c.l.bf16 %v28
  %v45 = vunpack.c.l.bf16 %v29
  %v46 = vunpack.c.l.bf16 %v30
  %v47 = vunpack.c.l.bf16 %v31
  %v48 = vunpack.c.l.bf16 %v32
  %v49 = vunpack.c.l.bf16 %v33
  %v50 = vunpack.c.l.bf16 %v34
  %v51 = vunpack.c.l.bf16 %v35
  %v52 = vunpack.c.l.bf16 %v36
  %v53 = vld [vmem:[%s1] sm:$0x1]
  %v55 = vlaneseq
  %v56 = vshrl.u32 %v55, 7
  %v57 = vsub.s32 0, %v56
  %v58 = vrot.slane %v53, %v57
  %v60 = vmul.f32 %v37, %v58
  %v61 = vmul.f32 %v38, %v58
  %v62 = vmul.f32 %v39, %v58
  %v63 = vmul.f32 %v40, %v58
  %v64 = vmul.f32 %v41, %v58
  %v65 = vmul.f32 %v42, %v58
  %v66 = vmul.f32 %v43, %v58
  %v67 = vmul.f32 %v44, %v58
  %v68 = vmul.f32 %v45, %v58
  %v69 = vmul.f32 %v46, %v58
  %v70 = vmul.f32 %v47, %v58
  %v71 = vmul.f32 %v48, %v58
  %v72 = vmul.f32 %v49, %v58
  %v73 = vmul.f32 %v50, %v58
  %v74 = vmul.f32 %v51, %v58
  %v75 = vmul.f32 %v52, %v58
  %v76 = vld [vmem:[%s2] sm:$0x1]
  %v78 = vlaneseq
  %v79 = vshrl.u32 %v78, 7
  %v80 = vsub.s32 0, %v79
  %v81 = vrot.slane %v76, %v80
  %v83 = vadd.f32 %v60, %v81
  %v84 = vadd.f32 %v61, %v81
  %v85 = vadd.f32 %v62, %v81
  %v86 = vadd.f32 %v63, %v81
  %v87 = vadd.f32 %v64, %v81
  %v88 = vadd.f32 %v65, %v81
  %v89 = vadd.f32 %v66, %v81
  %v90 = vadd.f32 %v67, %v81
  %v91 = vadd.f32 %v68, %v81
  %v92 = vadd.f32 %v69, %v81
  %v93 = vadd.f32 %v70, %v81
  %v94 = vadd.f32 %v71, %v81
  %v95 = vadd.f32 %v72, %v81
  %v96 = vadd.f32 %v73, %v81
  %v97 = vadd.f32 %v74, %v81
  %v98 = vadd.f32 %v75, %v81
  %vm99 = vcmask 130048
  %v100 = vsel %vm99, %v83, -inf
  %v101 = vsel %vm99, %v87, -inf
  %v102 = vmax.f32 %v100, %v101
  %v103 = vsel %vm99, %v91, -inf
  %v104 = vmax.f32 %v102, %v103
  %v105 = vsel %vm99, %v95, -inf
  %v106 = vmax.f32 %v104, %v105
  %v107 = vsel %vm99, %v84, -inf
  %v108 = vsel %vm99, %v88, -inf
  %v109 = vmax.f32 %v107, %v108
  %v110 = vsel %vm99, %v92, -inf
  %v111 = vmax.f32 %v109, %v110
  %v112 = vsel %vm99, %v96, -inf
  %v113 = vmax.f32 %v111, %v112
  %v114 = vsel %vm99, %v85, -inf
  %v115 = vsel %vm99, %v89, -inf
  %v116 = vmax.f32 %v114, %v115
  %v117 = vsel %vm99, %v93, -inf
  %v118 = vmax.f32 %v116, %v117
  %v119 = vsel %vm99, %v97, -inf
  %v120 = vmax.f32 %v118, %v119
  %v121 = vsel %vm99, %v86, -inf
  %v122 = vsel %vm99, %v90, -inf
  %v123 = vmax.f32 %v121, %v122
  %v124 = vsel %vm99, %v94, -inf
  %v125 = vmax.f32 %v123, %v124
  %v126 = vsel %vm99, %v98, -inf
  %v127 = vmax.f32 %v125, %v126
  %v128 = vmax.f32 %v106, 0.0
  %v129 = vmax.f32 %v113, 0.0
  %v130 = vmax.f32 %v120, 0.0
  %v131 = vmax.f32 %v127, 0.0
  %v132 = vpack.c.bf16 %v129, %v128
  %v133 = vpack.c.bf16 %v131, %v130
  %v134 = vld [vmem:[%s3] sm:$0xf]
  %v135 = vld [vmem:[%s3 + $0x4] sm:$0xf]
  %v136 = vld [vmem:[%s4] sm:$0xff]
  %v137 = vld [vmem:[%s4 + $0x8] sm:$0xff]
  %v138 = vld [vmem:[%s4 + $0x10] sm:$0xff]
  %v139 = vld [vmem:[%s4 + $0x18] sm:$0xff]
  %v142 = vunpack.c.l.b16 %v134
  %v143 = vunpack.c.l.b16 %v135
  %v144 = vpack.c.b16 %v143, %v142
  %v147 = vsel %vm99, %v132, 0
  %v150 = vsel %vm99, %v133, 0
  %152 = vmatprep.subr.bf16.mxu0 0
  %153 = vmatpush1.bf16.msra.mxu0 %v144
  %154 = vmatprep.subr.bf16.mxu0 0
  %155 = vmatpush1.bf16.msra.mxu0 0
  %156 = vmatprep.subr.bf16.mxu0 0
  %157 = vmatpush1.bf16.msra.mxu0 0
  %158 = vmatprep.subr.bf16.mxu0 0
  %159 = vmatpush1.bf16.msra.mxu0 0
  %160 = vmatprep.subr.bf16.mxu0 0
  %161 = vmatpush1.bf16.msra.mxu0 0
  %162 = vmatprep.subr.bf16.mxu0 0
  %163 = vmatpush1.bf16.msra.mxu0 0
  %164 = vmatprep.subr.bf16.mxu0 0
  %165 = vmatpush1.bf16.msra.mxu0 0
  %166 = vmatprep.subr.bf16.mxu0 0
  %167 = vmatpush1.bf16.msra.mxu0 0
  %168 = vmatprep.subr.bf16.mxu0 0
  %169 = vmatpush1.bf16.msra.mxu0 0
  %170 = vmatprep.subr.bf16.mxu0 0
  %171 = vmatpush1.bf16.msra.mxu0 0
  %172 = vmatprep.subr.bf16.mxu0 0
  %173 = vmatpush1.bf16.msra.mxu0 0
  %174 = vmatprep.subr.bf16.mxu0 0
  %175 = vmatpush1.bf16.msra.mxu0 0
  %176 = vmatprep.subr.bf16.mxu0 0
  %177 = vmatpush1.bf16.msra.mxu0 0
  %178 = vmatprep.subr.bf16.mxu0 0
  %179 = vmatpush1.bf16.msra.mxu0 0
  %180 = vmatprep.subr.bf16.mxu0 0
  %181 = vmatpush1.bf16.msra.mxu0 0
  %182 = vmatprep.subr.bf16.mxu0 0
  %183 = vmatpush1.bf16.msra.mxu0 0
  %184 = vmatprep.mubr.bf16.mxu0 0
  %185 = vmatmul.mubr.bf16.gmra.mrb[0].mxu0 %v147
  %v186 = vpop.f32.mrb[0].mxu0
  %v187 = vadd.f32 %v136, %v186
  %v188 = vpop.f32.mrb[0].mxu0
  %v189 = vpop.f32.mrb[0].mxu0
  %v190 = vadd.f32 %v137, %v189
  %v191 = vpop.f32.mrb[0].mxu0
  %192 = vmatprep.mubr.bf16.mxu0 0
  %193 = vmatmul.mubr.bf16.gmra.mrb[0].mxu0 %v150
  %v194 = vpop.f32.mrb[0].mxu0
  %v195 = vadd.f32 %v138, %v194
  %v196 = vpop.f32.mrb[0].mxu0
  %v197 = vpop.f32.mrb[0].mxu0
  %v198 = vadd.f32 %v139, %v197
  %v199 = vpop.f32.mrb[0].mxu0
  %200 = vdwg.mxu0
  %vm201 = vcmask 261120
  %202 = vst.msk [vmem:[%s5] sm:$0xff] %vm201, %v187
  %203 = vst.msk [vmem:[%s5 + $0x8] sm:$0xff] %vm201, %v190
  %204 = vst.msk [vmem:[%s5 + $0x10] sm:$0xff] %vm201, %v195
  %205 = vst.msk [vmem:[%s5 + $0x18] sm:$0xff] %vm201, %v198
  // Predicated region
  $region22: #{memory_encoder_forward.7} parent=0 // pred_check
    _
  $region23: #{memory_encoder_forward.7} parent=0 // pred_check_branch
    %207 = sbr.rel (0) target = $region25
  $region24: #{memory_encoder_forward.7} parent=0 // pred_region
    _
  $region25: #{memory_encoder_forward.7} parent=0 // pred_fallthru
    _
  // Predicated region
  $region26: #{memory_encoder_forward.7} parent=0 // pred_check
    _
  $region27: #{memory_encoder_forward.7} parent=0 // pred_check_branch
    %209 = sbr.rel (0) target = $region29
  $region28: #{memory_encoder_forward.7} parent=0 // pred_region
    _
  $region29: #{memory_encoder_forward.7} parent=0 // pred_fallthru
    _

// kernel: memory_encoder_forward.4
$region0: #{memory_encoder_forward.4}
  #allocation0 [shape = 'u32[]', space=smem, size = 0x4, offset = 0x4, fixed_abs, tag = 'smem constant byte address 0x4 - core index']
  #allocation1 [shape = 'u32[144,128]{1,0:T(1,128)}', space=vmem, size = 0x12000, scoped, tag = 'internal scratch']
  %s0 = inlined_call_operand.vmem [shape: bf16[4,128,36], index: 0, kind: input, shape index: {}]
  %s1 = inlined_call_operand.vmem [shape: bf16[36,8], index: 1, kind: input, shape index: {}]
  %s2 = inlined_call_operand.vmem [shape: bf16[4,128,8], index: 2, kind: output, shape index: {0}]
  %s3 = inlined_call_operand.vmem [shape: f32[1,1,8], index: 3, kind: output, shape index: {1}]
  %s4 = inlined_call_operand.vmem [shape: f32[1,1,8], index: 4, kind: output, shape index: {2}]
  %5 = xla_tuple %s2, %s3, %s4
  %s6 = sld [smem:[#allocation0]]
  $region38: #{memory_encoder_forward.4} parent=0
    _
  %s8 = ssub.s32 1, %s6
  %s9 = scalar_select 0, %s8, %s6
  // Predicated region
  $region2: #{memory_encoder_forward.4} parent=0 // pred_check
    _
  $region3: #{memory_encoder_forward.4} parent=0 // pred_check_branch
    %11 = sbr.rel (0) target = $region5
  $region4: #{memory_encoder_forward.4} parent=0 // pred_region
    %s12 = sadd.s32 0, 0
    %s13 = smul.u32 16, %s12
    %p14 = scmp.lt.s32.totalorder %s13, 15
    %s15 = scalar_select %p14, %s13, 15
    %s16 = smul.addr %s15, 4
    %s17 = scalar_lea.vmem %s0, %s16
    %s18 = sadd.s32 0, 0
    %s19 = smul.u32 16, %s18
  $region5: #{memory_encoder_forward.4} parent=0 // pred_fallthru
    _
  // Predicated region
  $region6: #{memory_encoder_forward.4} parent=0 // pred_check
    _
  $region7: #{memory_encoder_forward.4} parent=0 // pred_check_branch
    %21 = sbr.rel (0) target = $region9
  $region8: #{memory_encoder_forward.4} parent=0 // pred_region
    _
  $region9: #{memory_encoder_forward.4} parent=0 // pred_fallthru
    _
  %s22 = sadd.s32 0, 0
  %s23 = smul.u32 16, %s22
  %p24 = scmp.lt.s32.totalorder %s23, 15
  %s25 = scalar_select %p24, %s23, 15
  %s26 = smul.addr %s25, 4
  %s27 = scalar_lea.vmem %s0, %s26
  %s28 = sadd.s32 0, 0
  %s29 = smul.u32 16, %s28
  %p30 = scmp.lt.s32.totalorder %s29, 15
  %s31 = scalar_select %p30, %s29, 15
  %s32 = smul.addr %s31, 4
  %s33 = scalar_lea.vmem %s2, %s32
  %s34 = sadd.s32 0, 0
  %s35 = smul.u32 16, %s34
  %p36 = scmp.lt.s32.totalorder %s35, 15
  %s37 = scalar_select %p36, %s35, 15
  %s38 = smul.addr %s37, 4
  %s39 = scalar_lea.vmem %s0, %s38
  %s40 = sadd.s32 0, 0
  %s41 = smul.u32 16, %s40
  %s42 = sadd.s32 0, 0
  %s43 = smul.u32 16, %s42
  %p44 = scmp.lt.s32.totalorder %s43, 15
  %s45 = scalar_select %p44, %s43, 15
  %s46 = smul.addr %s45, 4
  %s47 = scalar_lea.vmem %s2, %s46
  %s48 = sadd.s32 0, 0
  %s49 = smul.u32 16, %s48
  %p51 = scmp.eq.s32.totalorder 0, 0
  // Predicated region
  $region10: #{memory_encoder_forward.4} parent=0 // pred_check
    %p52 = pneg %p51
  $region11: #{memory_encoder_forward.4} parent=0 // pred_check_branch
    %54 = sbr.rel (%p52) target = $region13
  $region12: #{memory_encoder_forward.4} parent=0 // pred_region
    %vm55 = vcmask 57344
    %56 = vst.msk [vmem:[%s3] sm:$0x1] %vm55, 0.0
    %57 = vst.msk [vmem:[%s4] sm:$0x1] %vm55, 0.0
  $region13: #{memory_encoder_forward.4} parent=0 // pred_fallthru
    _
  %v58 = vld [vmem:[%s39] sm:$0xf]
  %v59 = vld [vmem:[%s39 + $0x4] sm:$0xf]
  %v60 = vld [vmem:[%s39 + $0x8] sm:$0xf]
  %v61 = vld [vmem:[%s39 + $0xc] sm:$0xf]
  %v62 = vld [vmem:[%s39 + $0x10] sm:$0xf]
  %v63 = vld [vmem:[%s39 + $0x14] sm:$0xf]
  %v64 = vld [vmem:[%s39 + $0x18] sm:$0xf]
  %v65 = vld [vmem:[%s39 + $0x1c] sm:$0xf]
  %v66 = vld [vmem:[%s39 + $0x20] sm:$0xf]
  %v67 = vld [vmem:[%s39 + $0x24] sm:$0xf]
  %v68 = vld [vmem:[%s39 + $0x28] sm:$0xf]
  %v69 = vld [vmem:[%s39 + $0x2c] sm:$0xf]
  %v70 = vld [vmem:[%s39 + $0x30] sm:$0xf]
  %v71 = vld [vmem:[%s39 + $0x34] sm:$0xf]
  %v72 = vld [vmem:[%s39 + $0x38] sm:$0xf]
  %v73 = vld [vmem:[%s39 + $0x3c] sm:$0xf]
  %v74 = vld [vmem:[%s39 + $0x40] sm:$0xf]
  %v75 = vld [vmem:[%s39 + $0x44] sm:$0xf]
  %v76 = vld [vmem:[%s39 + $0x48] sm:$0xf]
  %v77 = vld [vmem:[%s39 + $0x4c] sm:$0xf]
  %v78 = vld [vmem:[%s39 + $0x50] sm:$0xf]
  %v79 = vld [vmem:[%s39 + $0x54] sm:$0xf]
  %v80 = vld [vmem:[%s39 + $0x58] sm:$0xf]
  %v81 = vld [vmem:[%s39 + $0x5c] sm:$0xf]
  %v82 = vld [vmem:[%s39 + $0x60] sm:$0xf]
  %v83 = vld [vmem:[%s39 + $0x64] sm:$0xf]
  %v84 = vld [vmem:[%s39 + $0x68] sm:$0xf]
  %v85 = vld [vmem:[%s39 + $0x6c] sm:$0xf]
  %v86 = vld [vmem:[%s39 + $0x70] sm:$0xf]
  %v87 = vld [vmem:[%s39 + $0x74] sm:$0xf]
  %v88 = vld [vmem:[%s39 + $0x78] sm:$0xf]
  %v89 = vld [vmem:[%s39 + $0x7c] sm:$0xf]
  %v90 = vld [vmem:[%s39 + $0x80] sm:$0xf]
  %v91 = vld [vmem:[%s39 + $0x84] sm:$0xf]
  %v92 = vld [vmem:[%s39 + $0x88] sm:$0xf]
  %v93 = vld [vmem:[%s39 + $0x8c] sm:$0xf]
  %v94 = vld [vmem:[%s39 + $0x90] sm:$0xf]
  %v95 = vld [vmem:[%s39 + $0x94] sm:$0xf]
  %v96 = vld [vmem:[%s39 + $0x98] sm:$0xf]
  %v97 = vld [vmem:[%s39 + $0x9c] sm:$0xf]
  %v98 = vld [vmem:[%s39 + $0xa0] sm:$0xf]
  %v99 = vld [vmem:[%s39 + $0xa4] sm:$0xf]
  %v100 = vld [vmem:[%s39 + $0xa8] sm:$0xf]
  %v101 = vld [vmem:[%s39 + $0xac] sm:$0xf]
  %v102 = vld [vmem:[%s39 + $0xb0] sm:$0xf]
  %v103 = vld [vmem:[%s39 + $0xb4] sm:$0xf]
  %v104 = vld [vmem:[%s39 + $0xb8] sm:$0xf]
  %v105 = vld [vmem:[%s39 + $0xbc] sm:$0xf]
  %v106 = vld [vmem:[%s39 + $0xc0] sm:$0xf]
  %v107 = vld [vmem:[%s39 + $0xc4] sm:$0xf]
  %v108 = vld [vmem:[%s39 + $0xc8] sm:$0xf]
  %v109 = vld [vmem:[%s39 + $0xcc] sm:$0xf]
  %v110 = vld [vmem:[%s39 + $0xd0] sm:$0xf]
  %v111 = vld [vmem:[%s39 + $0xd4] sm:$0xf]
  %v112 = vld [vmem:[%s39 + $0xd8] sm:$0xf]
  %v113 = vld [vmem:[%s39 + $0xdc] sm:$0xf]
  %v114 = vld [vmem:[%s39 + $0xe0] sm:$0xf]
  %v115 = vld [vmem:[%s39 + $0xe4] sm:$0xf]
  %v116 = vld [vmem:[%s39 + $0xe8] sm:$0xf]
  %v117 = vld [vmem:[%s39 + $0xec] sm:$0xf]
  %v118 = vld [vmem:[%s39 + $0xf0] sm:$0xf]
  %v119 = vld [vmem:[%s39 + $0xf4] sm:$0xf]
  %v120 = vld [vmem:[%s39 + $0xf8] sm:$0xf]
  %v121 = vld [vmem:[%s39 + $0xfc] sm:$0xf]
  %v122 = vld [vmem:[%s1] sm:$0xf]
  %v123 = vld [vmem:[%s1 + $0x4] sm:$0xf]
  %v124 = vld [vmem:[%s1 + $0x8] sm:$0xf]
  %v125 = vld [vmem:[%s1 + $0xc] sm:$0xf]
  %v126 = vld [vmem:[%s1 + $0x10] sm:$0x3]
  %v191 = vunpack.c.l.b16 %v58
  %v192 = vunpack.c.l.b16 %v59
  %v193 = vunpack.c.l.b16 %v60
  %v194 = vunpack.c.l.b16 %v61
  %v195 = vunpack.c.l.b16 %v62
  %v196 = vunpack.c.l.b16 %v63
  %v197 = vunpack.c.l.b16 %v64
  %v198 = vunpack.c.l.b16 %v65
  %v199 = vunpack.c.l.b16 %v66
  %v200 = vunpack.c.l.b16 %v67
  %v201 = vunpack.c.l.b16 %v68
  %v202 = vunpack.c.l.b16 %v69
  %v203 = vunpack.c.l.b16 %v70
  %v204 = vunpack.c.l.b16 %v71
  %v205 = vunpack.c.l.b16 %v72
  %v206 = vunpack.c.l.b16 %v73
  %v207 = vunpack.c.l.b16 %v74
  %v208 = vunpack.c.l.b16 %v75
  %v209 = vunpack.c.l.b16 %v76
  %v210 = vunpack.c.l.b16 %v77
  %v211 = vunpack.c.l.b16 %v78
  %v212 = vunpack.c.l.b16 %v79
  %v213 = vunpack.c.l.b16 %v80
  %v214 = vunpack.c.l.b16 %v81
  %v215 = vunpack.c.l.b16 %v82
  %v216 = vunpack.c.l.b16 %v83
  %v217 = vunpack.c.l.b16 %v84
  %v218 = vunpack.c.l.b16 %v85
  %v219 = vunpack.c.l.b16 %v86
  %v220 = vunpack.c.l.b16 %v87
  %v221 = vunpack.c.l.b16 %v88
  %v222 = vunpack.c.l.b16 %v89
  %v223 = vunpack.c.l.b16 %v90
  %v224 = vunpack.c.l.b16 %v91
  %v225 = vunpack.c.l.b16 %v92
  %v226 = vunpack.c.l.b16 %v93
  %v227 = vunpack.c.l.b16 %v94
  %v228 = vunpack.c.l.b16 %v95
  %v229 = vunpack.c.l.b16 %v96
  %v230 = vunpack.c.l.b16 %v97
  %v231 = vunpack.c.l.b16 %v98
  %v232 = vunpack.c.l.b16 %v99
  %v233 = vunpack.c.l.b16 %v100
  %v234 = vunpack.c.l.b16 %v101
  %v235 = vunpack.c.l.b16 %v102
  %v236 = vunpack.c.l.b16 %v103
  %v237 = vunpack.c.l.b16 %v104
  %v238 = vunpack.c.l.b16 %v105
  %v239 = vunpack.c.l.b16 %v106
  %v240 = vunpack.c.l.b16 %v107
  %v241 = vunpack.c.l.b16 %v108
  %v242 = vunpack.c.l.b16 %v109
  %v243 = vunpack.c.l.b16 %v110
  %v244 = vunpack.c.l.b16 %v111
  %v245 = vunpack.c.l.b16 %v112
  %v246 = vunpack.c.l.b16 %v113
  %v247 = vunpack.c.l.b16 %v114
  %v248 = vunpack.c.l.b16 %v115
  %v249 = vunpack.c.l.b16 %v116
  %v250 = vunpack.c.l.b16 %v117
  %v251 = vunpack.c.l.b16 %v118
  %v252 = vunpack.c.l.b16 %v119
  %v253 = vunpack.c.l.b16 %v120
  %v254 = vunpack.c.l.b16 %v121
  %v255 = vpack.c.b16 %v192, %v191
  %v256 = vpack.c.b16 %v194, %v193
  %v257 = vpack.c.b16 %v196, %v195
  %v258 = vpack.c.b16 %v198, %v197
  %v259 = vpack.c.b16 %v200, %v199
  %v260 = vpack.c.b16 %v202, %v201
  %v261 = vpack.c.b16 %v204, %v203
  %v262 = vpack.c.b16 %v206, %v205
  %v263 = vpack.c.b16 %v208, %v207
  %v264 = vpack.c.b16 %v210, %v209
  %v265 = vpack.c.b16 %v212, %v211
  %v266 = vpack.c.b16 %v214, %v213
  %v267 = vpack.c.b16 %v216, %v215
  %v268 = vpack.c.b16 %v218, %v217
  %v269 = vpack.c.b16 %v220, %v219
  %v270 = vpack.c.b16 %v222, %v221
  %v271 = vpack.c.b16 %v224, %v223
  %v272 = vpack.c.b16 %v226, %v225
  %v273 = vpack.c.b16 %v228, %v227
  %v274 = vpack.c.b16 %v230, %v229
  %v275 = vpack.c.b16 %v232, %v231
  %v276 = vpack.c.b16 %v234, %v233
  %v277 = vpack.c.b16 %v236, %v235
  %v278 = vpack.c.b16 %v238, %v237
  %v279 = vpack.c.b16 %v240, %v239
  %v280 = vpack.c.b16 %v242, %v241
  %v281 = vpack.c.b16 %v244, %v243
  %v282 = vpack.c.b16 %v246, %v245
  %v283 = vpack.c.b16 %v248, %v247
  %v284 = vpack.c.b16 %v250, %v249
  %v285 = vpack.c.b16 %v252, %v251
  %v286 = vpack.c.b16 %v254, %v253
  %v292 = vunpack.c.l.b16 %v122
  %v293 = vunpack.c.l.b16 %v123
  %v294 = vunpack.c.l.b16 %v124
  %v295 = vunpack.c.l.b16 %v125
  %v296 = vunpack.c.l.b16 %v126
  %v297 = vpack.c.b16 %v293, %v292
  %v298 = vpack.c.b16 %v295, %v294
  %v299 = vpack.c.b16 %v296, %v296
  %vm302 = vcmask 293888
  %v304 = vsel %vm302, %v255, 0
  %v307 = vsel %vm302, %v256, 0
  %v310 = vsel %vm302, %v257, 0
  %v313 = vsel %vm302, %v258, 0
  %v316 = vsel %vm302, %v259, 0
  %v319 = vsel %vm302, %v260, 0
  %v322 = vsel %vm302, %v261, 0
  %v325 = vsel %vm302, %v262, 0
  %v328 = vsel %vm302, %v263, 0
  %v331 = vsel %vm302, %v264, 0
  %v334 = vsel %vm302, %v265, 0
  %v337 = vsel %vm302, %v266, 0
  %v340 = vsel %vm302, %v267, 0
  %v343 = vsel %vm302, %v268, 0
  %v346 = vsel %vm302, %v269, 0
  %v349 = vsel %vm302, %v270, 0
  %v352 = vsel %vm302, %v271, 0
  %v355 = vsel %vm302, %v272, 0
  %v358 = vsel %vm302, %v273, 0
  %v361 = vsel %vm302, %v274, 0
  %v364 = vsel %vm302, %v275, 0
  %v367 = vsel %vm302, %v276, 0
  %v370 = vsel %vm302, %v277, 0
  %v373 = vsel %vm302, %v278, 0
  %v376 = vsel %vm302, %v279, 0
  %v379 = vsel %vm302, %v280, 0
  %v382 = vsel %vm302, %v281, 0
  %v385 = vsel %vm302, %v282, 0
  %v388 = vsel %vm302, %v283, 0
  %v391 = vsel %vm302, %v284, 0
  %v394 = vsel %vm302, %v285, 0
  %v397 = vsel %vm302, %v286, 0
  %vm399 = vcmask 1041408
  %v401 = vsel %vm399, %v299, 0
  %403 = vmatprep.subr.bf16.mxu0 0
  %404 = vmatpush1.bf16.msra.mxu0 %v297
  %405 = vmatprep.subr.bf16.mxu0 0
  %406 = vmatpush1.bf16.msra.mxu0 %v298
  %407 = vmatprep.subr.bf16.mxu0 0
  %408 = vmatpush1.bf16.msra.mxu0 %v401
  %409 = vmatprep.subr.bf16.mxu0 0
  %410 = vmatpush1.bf16.msra.mxu0 0
  %411 = vmatprep.subr.bf16.mxu0 0
  %412 = vmatpush1.bf16.msra.mxu0 0
  %413 = vmatprep.subr.bf16.mxu0 0
  %414 = vmatpush1.bf16.msra.mxu0 0
  %415 = vmatprep.subr.bf16.mxu0 0
  %416 = vmatpush1.bf16.msra.mxu0 0
  %417 = vmatprep.subr.bf16.mxu0 0
  %418 = vmatpush1.bf16.msra.mxu0 0
  %419 = vmatprep.subr.bf16.mxu0 0
  %420 = vmatpush1.bf16.msra.mxu0 0
  %421 = vmatprep.subr.bf16.mxu0 0
  %422 = vmatpush1.bf16.msra.mxu0 0
  %423 = vmatprep.subr.bf16.mxu0 0
  %424 = vmatpush1.bf16.msra.mxu0 0
  %425 = vmatprep.subr.bf16.mxu0 0
  %426 = vmatpush1.bf16.msra.mxu0 0
  %427 = vmatprep.subr.bf16.mxu0 0
  %428 = vmatpush1.bf16.msra.mxu0 0
  %429 = vmatprep.subr.bf16.mxu0 0
  %430 = vmatpush1.bf16.msra.mxu0 0
  %431 = vmatprep.subr.bf16.mxu0 0
  %432 = vmatpush1.bf16.msra.mxu0 0
  %433 = vmatprep.subr.bf16.mxu0 0
  %434 = vmatpush1.bf16.msra.mxu0 0
  %435 = vmatprep.mubr.bf16.mxu0 0
  %436 = vmatmul.mubr.bf16.gmra.mrb[0].mxu0 %v304
  %v437 = vpop.f32.mrb[0].mxu0
  %v438 = vadd.f32 0.0, %v437
  %v439 = vpop.f32.mrb[0].mxu0
  %v440 = vpop.f32.mrb[0].mxu0
  %v441 = vadd.f32 0.0, %v440
  %v442 = vpop.f32.mrb[0].mxu0
  %443 = vmatprep.mubr.bf16.mxu0 0
  %444 = vmatmul.mubr.bf16.gmra.mrb[0].mxu0 %v307
  %v445 = vpop.f32.mrb[0].mxu0
  %v446 = vadd.f32 0.0, %v445
  %v447 = vpop.f32.mrb[0].mxu0
  %v448 = vpop.f32.mrb[0].mxu0
  %v449 = vadd.f32 0.0, %v448
  %v450 = vpop.f32.mrb[0].mxu0
  %451 = vmatprep.mubr.bf16.mxu0 0
  %452 = vmatmul.mubr.bf16.gmra.mrb[0].mxu0 %v310
  %v453 = vpop.f32.mrb[0].mxu0
  %v454 = vadd.f32 0.0, %v453
  %v455 = vpop.f32.mrb[0].mxu0
  %v456 = vpop.f32.mrb[0].mxu0
  %v457 = vadd.f32 0.0, %v456
  %v458 = vpop.f32.mrb[0].mxu0
  %459 = vmatprep.mubr.bf16.mxu0 0
  %460 = vmatmul.mubr.bf16.gmra.mrb[0].mxu0 %v313
  %v461 = vpop.f32.mrb[0].mxu0
  %v462 = vadd.f32 0.0, %v461
  %v463 = vpop.f32.mrb[0].mxu0
  %v464 = vpop.f32.mrb[0].mxu0
  %v465 = vadd.f32 0.0, %v464
  %v466 = vpop.f32.mrb[0].mxu0
  %467 = vmatprep.mubr.bf16.mxu0 0
  %468 = vmatmul.mubr.bf16.gmra.mrb[0].mxu0 %v316
  %v469 = vpop.f32.mrb[0].mxu0
  %v470 = vadd.f32 0.0, %v469
  %v471 = vpop.f32.mrb[0].mxu0
  %v472 = vpop.f32.mrb[0].mxu0
  %v473 = vadd.f32 0.0, %v472
  %v474 = vpop.f32.mrb[0].mxu0
  %475 = vmatprep.mubr.bf16.mxu0 0
  %476 = vmatmul.mubr.bf16.gmra.mrb[0].mxu0 %v319
  %v477 = vpop.f32.mrb[0].mxu0
  %v478 = vadd.f32 0.0, %v477
  %v479 = vpop.f32.mrb[0].mxu0
  %v480 = vpop.f32.mrb[0].mxu0
  %v481 = vadd.f32 0.0, %v480
  %v482 = vpop.f32.mrb[0].mxu0
  %483 = vmatprep.mubr.bf16.mxu0 0
  %484 = vmatmul.mubr.bf16.gmra.mrb[0].mxu0 %v322
  %v485 = vpop.f32.mrb[0].mxu0
  %v486 = vadd.f32 0.0, %v485
  %v487 = vpop.f32.mrb[0].mxu0
  %v488 = vpop.f32.mrb[0].mxu0
  %v489 = vadd.f32 0.0, %v488
  %v490 = vpop.f32.mrb[0].mxu0
  %491 = vmatprep.mubr.bf16.mxu0 0
  %492 = vmatmul.mubr.bf16.gmra.mrb[0].mxu0 %v325
  %v493 = vpop.f32.mrb[0].mxu0
  %v494 = vadd.f32 0.0, %v493
  %v495 = vpop.f32.mrb[0].mxu0
  %v496 = vpop.f32.mrb[0].mxu0
  %v497 = vadd.f32 0.0, %v496
  %v498 = vpop.f32.mrb[0].mxu0
  %499 = vmatprep.mubr.bf16.mxu0 0
  %500 = vmatmul.mubr.bf16.gmra.mrb[0].mxu0 %v328
  %v501 = vpop.f32.mrb[0].mxu0
  %v502 = vadd.f32 0.0, %v501
  %v503 = vpop.f32.mrb[0].mxu0
  %v504 = vpop.f32.mrb[0].mxu0
  %v505 = vadd.f32 0.0, %v504
  %v506 = vpop.f32.mrb[0].mxu0
  %507 = vmatprep.mubr.bf16.mxu0 0
  %508 = vmatmul.mubr.bf16.gmra.mrb[0].mxu0 %v331
  %v509 = vpop.f32.mrb[0].mxu0
  %v510 = vadd.f32 0.0, %v509
  %v511 = vpop.f32.mrb[0].mxu0
  %v512 = vpop.f32.mrb[0].mxu0
  %v513 = vadd.f32 0.0, %v512
  %v514 = vpop.f32.mrb[0].mxu0
  %515 = vmatprep.mubr.bf16.mxu0 0
  %516 = vmatmul.mubr.bf16.gmra.mrb[0].mxu0 %v334
  %v517 = vpop.f32.mrb[0].mxu0
  %v518 = vadd.f32 0.0, %v517
  %v519 = vpop.f32.mrb[0].mxu0
  %v520 = vpop.f32.mrb[0].mxu0
  %v521 = vadd.f32 0.0, %v520
  %v522 = vpop.f32.mrb[0].mxu0
  %523 = vmatprep.mubr.bf16.mxu0 0
  %524 = vmatmul.mubr.bf16.gmra.mrb[0].mxu0 %v337
  %v525 = vpop.f32.mrb[0].mxu0
  %v526 = vadd.f32 0.0, %v525
  %v527 = vpop.f32.mrb[0].mxu0
  %v528 = vpop.f32.mrb[0].mxu0
  %v529 = vadd.f32 0.0, %v528
  %v530 = vpop.f32.mrb[0].mxu0
  %531 = vmatprep.mubr.bf16.mxu0 0
  %532 = vmatmul.mubr.bf16.gmra.mrb[0].mxu0 %v340
  %v533 = vpop.f32.mrb[0].mxu0
  %v534 = vadd.f32 0.0, %v533
  %v535 = vpop.f32.mrb[0].mxu0
  %v536 = vpop.f32.mrb[0].mxu0
  %v537 = vadd.f32 0.0, %v536
  %v538 = vpop.f32.mrb[0].mxu0
  %539 = vmatprep.mubr.bf16.mxu0 0
  %540 = vmatmul.mubr.bf16.gmra.mrb[0].mxu0 %v343
  %v541 = vpop.f32.mrb[0].mxu0
  %v542 = vadd.f32 0.0, %v541
  %v543 = vpop.f32.mrb[0].mxu0
  %v544 = vpop.f32.mrb[0].mxu0
  %v545 = vadd.f32 0.0, %v544
  %v546 = vpop.f32.mrb[0].mxu0
  %547 = vmatprep.mubr.bf16.mxu0 0
  %548 = vmatmul.mubr.bf16.gmra.mrb[0].mxu0 %v346
  %v549 = vpop.f32.mrb[0].mxu0
  %v550 = vadd.f32 0.0, %v549
  %v551 = vpop.f32.mrb[0].mxu0
  %v552 = vpop.f32.mrb[0].mxu0
  %v553 = vadd.f32 0.0, %v552
  %v554 = vpop.f32.mrb[0].mxu0
  %555 = vmatprep.mubr.bf16.mxu0 0
  %556 = vmatmul.mubr.bf16.gmra.mrb[0].mxu0 %v349
  %v557 = vpop.f32.mrb[0].mxu0
  %v558 = vadd.f32 0.0, %v557
  %v559 = vpop.f32.mrb[0].mxu0
  %v560 = vpop.f32.mrb[0].mxu0
  %v561 = vadd.f32 0.0, %v560
  %v562 = vpop.f32.mrb[0].mxu0
  %563 = vmatprep.mubr.bf16.mxu0 0
  %564 = vmatmul.mubr.bf16.gmra.mrb[0].mxu0 %v352
  %v565 = vpop.f32.mrb[0].mxu0
  %v566 = vadd.f32 0.0, %v565
  %v567 = vpop.f32.mrb[0].mxu0
  %v568 = vpop.f32.mrb[0].mxu0
  %v569 = vadd.f32 0.0, %v568
  %v570 = vpop.f32.mrb[0].mxu0
  %571 = vmatprep.mubr.bf16.mxu0 0
  %572 = vmatmul.mubr.bf16.gmra.mrb[0].mxu0 %v355
  %v573 = vpop.f32.mrb[0].mxu0
  %v574 = vadd.f32 0.0, %v573
  %v575 = vpop.f32.mrb[0].mxu0
  %v576 = vpop.f32.mrb[0].mxu0
  %v577 = vadd.f32 0.0, %v576
  %v578 = vpop.f32.mrb[0].mxu0
  %579 = vmatprep.mubr.bf16.mxu0 0
  %580 = vmatmul.mubr.bf16.gmra.mrb[0].mxu0 %v358
  %v581 = vpop.f32.mrb[0].mxu0
  %v582 = vadd.f32 0.0, %v581
  %v583 = vpop.f32.mrb[0].mxu0
  %v584 = vpop.f32.mrb[0].mxu0
  %v585 = vadd.f32 0.0, %v584
  %v586 = vpop.f32.mrb[0].mxu0
  %587 = vmatprep.mubr.bf16.mxu0 0
  %588 = vmatmul.mubr.bf16.gmra.mrb[0].mxu0 %v361
  %v589 = vpop.f32.mrb[0].mxu0
  %v590 = vadd.f32 0.0, %v589
  %v591 = vpop.f32.mrb[0].mxu0
  %v592 = vpop.f32.mrb[0].mxu0
  %v593 = vadd.f32 0.0, %v592
  %v594 = vpop.f32.mrb[0].mxu0
  %595 = vmatprep.mubr.bf16.mxu0 0
  %596 = vmatmul.mubr.bf16.gmra.mrb[0].mxu0 %v364
  %v597 = vpop.f32.mrb[0].mxu0
  %v598 = vadd.f32 0.0, %v597
  %v599 = vpop.f32.mrb[0].mxu0
  %v600 = vpop.f32.mrb[0].mxu0
  %v601 = vadd.f32 0.0, %v600
  %v602 = vpop.f32.mrb[0].mxu0
  %603 = vmatprep.mubr.bf16.mxu0 0
  %604 = vmatmul.mubr.bf16.gmra.mrb[0].mxu0 %v367
  %v605 = vpop.f32.mrb[0].mxu0
  %v606 = vadd.f32 0.0, %v605
  %v607 = vpop.f32.mrb[0].mxu0
  %v608 = vpop.f32.mrb[0].mxu0
  %v609 = vadd.f32 0.0, %v608
  %v610 = vpop.f32.mrb[0].mxu0
  %611 = vmatprep.mubr.bf16.mxu0 0
  %612 = vmatmul.mubr.bf16.gmra.mrb[0].mxu0 %v370
  %v613 = vpop.f32.mrb[0].mxu0
  %v614 = vadd.f32 0.0, %v613
  %v615 = vpop.f32.mrb[0].mxu0
  %v616 = vpop.f32.mrb[0].mxu0
  %v617 = vadd.f32 0.0, %v616
  %v618 = vpop.f32.mrb[0].mxu0
  %619 = vmatprep.mubr.bf16.mxu0 0
  %620 = vmatmul.mubr.bf16.gmra.mrb[0].mxu0 %v373
  %v621 = vpop.f32.mrb[0].mxu0
  %v622 = vadd.f32 0.0, %v621
  %v623 = vpop.f32.mrb[0].mxu0
  %v624 = vpop.f32.mrb[0].mxu0
  %v625 = vadd.f32 0.0, %v624
  %v626 = vpop.f32.mrb[0].mxu0
  %627 = vmatprep.mubr.bf16.mxu0 0
  %628 = vmatmul.mubr.bf16.gmra.mrb[0].mxu0 %v376
  %v629 = vpop.f32.mrb[0].mxu0
  %v630 = vadd.f32 0.0, %v629
  %v631 = vpop.f32.mrb[0].mxu0
  %v632 = vpop.f32.mrb[0].mxu0
  %v633 = vadd.f32 0.0, %v632
  %v634 = vpop.f32.mrb[0].mxu0
  %635 = vmatprep.mubr.bf16.mxu0 0
  %636 = vmatmul.mubr.bf16.gmra.mrb[0].mxu0 %v379
  %v637 = vpop.f32.mrb[0].mxu0
  %v638 = vadd.f32 0.0, %v637
  %v639 = vpop.f32.mrb[0].mxu0
  %v640 = vpop.f32.mrb[0].mxu0
  %v641 = vadd.f32 0.0, %v640
  %v642 = vpop.f32.mrb[0].mxu0
  %643 = vmatprep.mubr.bf16.mxu0 0
  %644 = vmatmul.mubr.bf16.gmra.mrb[0].mxu0 %v382
  %v645 = vpop.f32.mrb[0].mxu0
  %v646 = vadd.f32 0.0, %v645
  %v647 = vpop.f32.mrb[0].mxu0
  %v648 = vpop.f32.mrb[0].mxu0
  %v649 = vadd.f32 0.0, %v648
  %v650 = vpop.f32.mrb[0].mxu0
  %651 = vmatprep.mubr.bf16.mxu0 0
  %652 = vmatmul.mubr.bf16.gmra.mrb[0].mxu0 %v385
  %v653 = vpop.f32.mrb[0].mxu0
  %v654 = vadd.f32 0.0, %v653
  %v655 = vpop.f32.mrb[0].mxu0
  %v656 = vpop.f32.mrb[0].mxu0
  %v657 = vadd.f32 0.0, %v656
  %v658 = vpop.f32.mrb[0].mxu0
  %659 = vmatprep.mubr.bf16.mxu0 0
  %660 = vmatmul.mubr.bf16.gmra.mrb[0].mxu0 %v388
  %v661 = vpop.f32.mrb[0].mxu0
  %v662 = vadd.f32 0.0, %v661
  %v663 = vpop.f32.mrb[0].mxu0
  %v664 = vpop.f32.mrb[0].mxu0
  %v665 = vadd.f32 0.0, %v664
  %v666 = vpop.f32.mrb[0].mxu0
  %667 = vmatprep.mubr.bf16.mxu0 0
  %668 = vmatmul.mubr.bf16.gmra.mrb[0].mxu0 %v391
  %v669 = vpop.f32.mrb[0].mxu0
  %v670 = vadd.f32 0.0, %v669
  %v671 = vpop.f32.mrb[0].mxu0
  %v672 = vpop.f32.mrb[0].mxu0
  %v673 = vadd.f32 0.0, %v672
  %v674 = vpop.f32.mrb[0].mxu0
  %675 = vmatprep.mubr.bf16.mxu0 0
  %676 = vmatmul.mubr.bf16.gmra.mrb[0].mxu0 %v394
  %v677 = vpop.f32.mrb[0].mxu0
  %v678 = vadd.f32 0.0, %v677
  %v679 = vpop.f32.mrb[0].mxu0
  %v680 = vpop.f32.mrb[0].mxu0
  %v681 = vadd.f32 0.0, %v680
  %v682 = vpop.f32.mrb[0].mxu0
  %683 = vmatprep.mubr.bf16.mxu0 0
  %684 = vmatmul.mubr.bf16.gmra.mrb[0].mxu0 %v397
  %v685 = vpop.f32.mrb[0].mxu0
  %v686 = vadd.f32 0.0, %v685
  %v687 = vpop.f32.mrb[0].mxu0
  %v688 = vpop.f32.mrb[0].mxu0
  %v689 = vadd.f32 0.0, %v688
  %v690 = vpop.f32.mrb[0].mxu0
  %691 = vdwg.mxu0
  %v692 = vld [vmem:[%s3] sm:$0x1]
  %vm693 = vcmask 64512
  %v694 = vsel %vm693, %v438, 0.0
  %v695 = vsel %vm693, %v441, 0.0
  %v696 = vadd.f32 %v694, %v695
  %v697 = vsel %vm693, %v446, 0.0
  %v698 = vadd.f32 %v696, %v697
  %v699 = vsel %vm693, %v449, 0.0
  %v700 = vadd.f32 %v698, %v699
  %v701 = vsel %vm693, %v454, 0.0
  %v702 = vadd.f32 %v700, %v701
  %v703 = vsel %vm693, %v457, 0.0
  %v704 = vadd.f32 %v702, %v703
  %v705 = vsel %vm693, %v462, 0.0
  %v706 = vadd.f32 %v704, %v705
  %v707 = vsel %vm693, %v465, 0.0
  %v708 = vadd.f32 %v706, %v707
  %v709 = vsel %vm693, %v470, 0.0
  %v710 = vadd.f32 %v708, %v709
  %v711 = vsel %vm693, %v473, 0.0
  %v712 = vadd.f32 %v710, %v711
  %v713 = vsel %vm693, %v478, 0.0
  %v714 = vadd.f32 %v712, %v713
  %v715 = vsel %vm693, %v481, 0.0
  %v716 = vadd.f32 %v714, %v715
  %v717 = vsel %vm693, %v486, 0.0
  %v718 = vadd.f32 %v716, %v717
  %v719 = vsel %vm693, %v489, 0.0
  %v720 = vadd.f32 %v718, %v719
  %v721 = vsel %vm693, %v494, 0.0
  %v722 = vadd.f32 %v720, %v721
  %v723 = vsel %vm693, %v497, 0.0
  %v724 = vadd.f32 %v722, %v723
  %v725 = vsel %vm693, %v502, 0.0
  %v726 = vadd.f32 %v724, %v725
  %v727 = vsel %vm693, %v505, 0.0
  %v728 = vadd.f32 %v726, %v727
  %v729 = vsel %vm693, %v510, 0.0
  %v730 = vadd.f32 %v728, %v729
  %v731 = vsel %vm693, %v513, 0.0
  %v732 = vadd.f32 %v730, %v731
  %v733 = vsel %vm693, %v518, 0.0
  %v734 = vadd.f32 %v732, %v733
  %v735 = vsel %vm693, %v521, 0.0
  %v736 = vadd.f32 %v734, %v735
  %v737 = vsel %vm693, %v526, 0.0
  %v738 = vadd.f32 %v736, %v737
  %v739 = vsel %vm693, %v529, 0.0
  %v740 = vadd.f32 %v738, %v739
  %v741 = vsel %vm693, %v534, 0.0
  %v742 = vadd.f32 %v740, %v741
  %v743 = vsel %vm693, %v537, 0.0
  %v744 = vadd.f32 %v742, %v743
  %v745 = vsel %vm693, %v542, 0.0
  %v746 = vadd.f32 %v744, %v745
  %v747 = vsel %vm693, %v545, 0.0
  %v748 = vadd.f32 %v746, %v747
  %v749 = vsel %vm693, %v550, 0.0
  %v750 = vadd.f32 %v748, %v749
  %v751 = vsel %vm693, %v553, 0.0
  %v752 = vadd.f32 %v750, %v751
  %v753 = vsel %vm693, %v558, 0.0
  %v754 = vadd.f32 %v752, %v753
  %v755 = vsel %vm693, %v561, 0.0
  %v756 = vadd.f32 %v754, %v755
  %v757 = vsel %vm693, %v566, 0.0
  %v758 = vadd.f32 %v756, %v757
  %v759 = vsel %vm693, %v569, 0.0
  %v760 = vadd.f32 %v758, %v759
  %v761 = vsel %vm693, %v574, 0.0
  %v762 = vadd.f32 %v760, %v761
  %v763 = vsel %vm693, %v577, 0.0
  %v764 = vadd.f32 %v762, %v763
  %v765 = vsel %vm693, %v582, 0.0
  %v766 = vadd.f32 %v764, %v765
  %v767 = vsel %vm693, %v585, 0.0
  %v768 = vadd.f32 %v766, %v767
  %v769 = vsel %vm693, %v590, 0.0
  %v770 = vadd.f32 %v768, %v769
  %v771 = vsel %vm693, %v593, 0.0
  %v772 = vadd.f32 %v770, %v771
  %v773 = vsel %vm693, %v598, 0.0
  %v774 = vadd.f32 %v772, %v773
  %v775 = vsel %vm693, %v601, 0.0
  %v776 = vadd.f32 %v774, %v775
  %v777 = vsel %vm693, %v606, 0.0
  %v778 = vadd.f32 %v776, %v777
  %v779 = vsel %vm693, %v609, 0.0
  %v780 = vadd.f32 %v778, %v779
  %v781 = vsel %vm693, %v614, 0.0
  %v782 = vadd.f32 %v780, %v781
  %v783 = vsel %vm693, %v617, 0.0
  %v784 = vadd.f32 %v782, %v783
  %v785 = vsel %vm693, %v622, 0.0
  %v786 = vadd.f32 %v784, %v785
  %v787 = vsel %vm693, %v625, 0.0
  %v788 = vadd.f32 %v786, %v787
  %v789 = vsel %vm693, %v630, 0.0
  %v790 = vadd.f32 %v788, %v789
  %v791 = vsel %vm693, %v633, 0.0
  %v792 = vadd.f32 %v790, %v791
  %v793 = vsel %vm693, %v638, 0.0
  %v794 = vadd.f32 %v792, %v793
  %v795 = vsel %vm693, %v641, 0.0
  %v796 = vadd.f32 %v794, %v795
  %v797 = vsel %vm693, %v646, 0.0
  %v798 = vadd.f32 %v796, %v797
  %v799 = vsel %vm693, %v649, 0.0
  %v800 = vadd.f32 %v798, %v799
  %v801 = vsel %vm693, %v654, 0.0
  %v802 = vadd.f32 %v800, %v801
  %v803 = vsel %vm693, %v657, 0.0
  %v804 = vadd.f32 %v802, %v803
  %v805 = vsel %vm693, %v662, 0.0
  %v806 = vadd.f32 %v804, %v805
  %v807 = vsel %vm693, %v665, 0.0
  %v808 = vadd.f32 %v806, %v807
  %v809 = vsel %vm693, %v670, 0.0
  %v810 = vadd.f32 %v808, %v809
  %v811 = vsel %vm693, %v673, 0.0
  %v812 = vadd.f32 %v810, %v811
  %v813 = vsel %vm693, %v678, 0.0
  %v814 = vadd.f32 %v812, %v813
  %v815 = vsel %vm693, %v681, 0.0
  %v816 = vadd.f32 %v814, %v815
  %v817 = vsel %vm693, %v686, 0.0
  %v818 = vadd.f32 %v816, %v817
  %v819 = vsel %vm693, %v689, 0.0
  %v820 = vadd.f32 %v818, %v819
  %v821 = vrot.slane %v820, 4
  %v822 = vadd.f32 %v820, %v821
  %v823 = vrot.slane %v822, 2
  %v824 = vadd.f32 %v822, %v823
  %v825 = vrot.slane %v824, 1
  %v826 = vadd.f32 %v824, %v825
  %v827 = vadd.f32 %v692, %v826
  %vm828 = vcmask 57344
  %829 = vst.msk [vmem:[%s3] sm:$0x1] %vm828, %v827
  %v830 = vld [vmem:[%s4] sm:$0x1]
  %v831 = vmul.f32 %v438, %v438
  %v832 = vmul.f32 %v441, %v441
  %v833 = vmul.f32 %v446, %v446
  %v834 = vmul.f32 %v449, %v449
  %v835 = vmul.f32 %v454, %v454
  %v836 = vmul.f32 %v457, %v457
  %v837 = vmul.f32 %v462, %v462
  %v838 = vmul.f32 %v465, %v465
  %v839 = vmul.f32 %v470, %v470
  %v840 = vmul.f32 %v473, %v473
  %v841 = vmul.f32 %v478, %v478
  %v842 = vmul.f32 %v481, %v481
  %v843 = vmul.f32 %v486, %v486
  %v844 = vmul.f32 %v489, %v489
  %v845 = vmul.f32 %v494, %v494
  %v846 = vmul.f32 %v497, %v497
  %v847 = vmul.f32 %v502, %v502
  %v848 = vmul.f32 %v505, %v505
  %v849 = vmul.f32 %v510, %v510
  %v850 = vmul.f32 %v513, %v513
  %v851 = vmul.f32 %v518, %v518
  %v852 = vmul.f32 %v521, %v521
  %v853 = vmul.f32 %v526, %v526
  %v854 = vmul.f32 %v529, %v529
  %v855 = vmul.f32 %v534, %v534
  %v856 = vmul.f32 %v537, %v537
  %v857 = vmul.f32 %v542, %v542
  %v858 = vmul.f32 %v545, %v545
  %v859 = vmul.f32 %v550, %v550
  %v860 = vmul.f32 %v553, %v553
  %v861 = vmul.f32 %v558, %v558
  %v862 = vmul.f32 %v561, %v561
  %v863 = vmul.f32 %v566, %v566
  %v864 = vmul.f32 %v569, %v569
  %v865 = vmul.f32 %v574, %v574
  %v866 = vmul.f32 %v577, %v577
  %v867 = vmul.f32 %v582, %v582
  %v868 = vmul.f32 %v585, %v585
  %v869 = vmul.f32 %v590, %v590
  %v870 = vmul.f32 %v593, %v593
  %v871 = vmul.f32 %v598, %v598
  %v872 = vmul.f32 %v601, %v601
  %v873 = vmul.f32 %v606, %v606
  %v874 = vmul.f32 %v609, %v609
  %v875 = vmul.f32 %v614, %v614
  %v876 = vmul.f32 %v617, %v617
  %v877 = vmul.f32 %v622, %v622
  %v878 = vmul.f32 %v625, %v625
  %v879 = vmul.f32 %v630, %v630
  %v880 = vmul.f32 %v633, %v633
  %v881 = vmul.f32 %v638, %v638
  %v882 = vmul.f32 %v641, %v641
  %v883 = vmul.f32 %v646, %v646
  %v884 = vmul.f32 %v649, %v649
  %v885 = vmul.f32 %v654, %v654
  %v886 = vmul.f32 %v657, %v657
  %v887 = vmul.f32 %v662, %v662
  %v888 = vmul.f32 %v665, %v665
  %v889 = vmul.f32 %v670, %v670
  %v890 = vmul.f32 %v673, %v673
  %v891 = vmul.f32 %v678, %v678
  %v892 = vmul.f32 %v681, %v681
  %v893 = vmul.f32 %v686, %v686
  %v894 = vmul.f32 %v689, %v689
  %v895 = vsel %vm693, %v831, 0.0
  %v896 = vsel %vm693, %v832, 0.0
  %v897 = vadd.f32 %v895, %v896
  %v898 = vsel %vm693, %v833, 0.0
  %v899 = vadd.f32 %v897, %v898
  %v900 = vsel %vm693, %v834, 0.0
  %v901 = vadd.f32 %v899, %v900
  %v902 = vsel %vm693, %v835, 0.0
  %v903 = vadd.f32 %v901, %v902
  %v904 = vsel %vm693, %v836, 0.0
  %v905 = vadd.f32 %v903, %v904
  %v906 = vsel %vm693, %v837, 0.0
  %v907 = vadd.f32 %v905, %v906
  %v908 = vsel %vm693, %v838, 0.0
  %v909 = vadd.f32 %v907, %v908
  %v910 = vsel %vm693, %v839, 0.0
  %v911 = vadd.f32 %v909, %v910
  %v912 = vsel %vm693, %v840, 0.0
  %v913 = vadd.f32 %v911, %v912
  %v914 = vsel %vm693, %v841, 0.0
  %v915 = vadd.f32 %v913, %v914
  %v916 = vsel %vm693, %v842, 0.0
  %v917 = vadd.f32 %v915, %v916
  %v918 = vsel %vm693, %v843, 0.0
  %v919 = vadd.f32 %v917, %v918
  %v920 = vsel %vm693, %v844, 0.0
  %v921 = vadd.f32 %v919, %v920
  %v922 = vsel %vm693, %v845, 0.0
  %v923 = vadd.f32 %v921, %v922
  %v924 = vsel %vm693, %v846, 0.0
  %v925 = vadd.f32 %v923, %v924
  %v926 = vsel %vm693, %v847, 0.0
  %v927 = vadd.f32 %v925, %v926
  %v928 = vsel %vm693, %v848, 0.0
  %v929 = vadd.f32 %v927, %v928
  %v930 = vsel %vm693, %v849, 0.0
  %v931 = vadd.f32 %v929, %v930
  %v932 = vsel %vm693, %v850, 0.0
  %v933 = vadd.f32 %v931, %v932
  %v934 = vsel %vm693, %v851, 0.0
  %v935 = vadd.f32 %v933, %v934
  %v936 = vsel %vm693, %v852, 0.0
  %v937 = vadd.f32 %v935, %v936
  %v938 = vsel %vm693, %v853, 0.0
  %v939 = vadd.f32 %v937, %v938
  %v940 = vsel %vm693, %v854, 0.0
  %v941 = vadd.f32 %v939, %v940
  %v942 = vsel %vm693, %v855, 0.0
  %v943 = vadd.f32 %v941, %v942
  %v944 = vsel %vm693, %v856, 0.0
  %v945 = vadd.f32 %v943, %v944
  %v946 = vsel %vm693, %v857, 0.0
  %v947 = vadd.f32 %v945, %v946
  %v948 = vsel %vm693, %v858, 0.0
  %v949 = vadd.f32 %v947, %v948
  %v950 = vsel %vm693, %v859, 0.0
  %v951 = vadd.f32 %v949, %v950
  %v952 = vsel %vm693, %v860, 0.0
  %v953 = vadd.f32 %v951, %v952
  %v954 = vsel %vm693, %v861, 0.0
  %v955 = vadd.f32 %v953, %v954
  %v956 = vsel %vm693, %v862, 0.0
  %v957 = vadd.f32 %v955, %v956
  %v958 = vsel %vm693, %v863, 0.0
  %v959 = vadd.f32 %v957, %v958
  %v960 = vsel %vm693, %v864, 0.0
  %v961 = vadd.f32 %v959, %v960
  %v962 = vsel %vm693, %v865, 0.0
  %v963 = vadd.f32 %v961, %v962
  %v964 = vsel %vm693, %v866, 0.0
  %v965 = vadd.f32 %v963, %v964
  %v966 = vsel %vm693, %v867, 0.0
  %v967 = vadd.f32 %v965, %v966
  %v968 = vsel %vm693, %v868, 0.0
  %v969 = vadd.f32 %v967, %v968
  %v970 = vsel %vm693, %v869, 0.0
  %v971 = vadd.f32 %v969, %v970
  %v972 = vsel %vm693, %v870, 0.0
  %v973 = vadd.f32 %v971, %v972
  %v974 = vsel %vm693, %v871, 0.0
  %v975 = vadd.f32 %v973, %v974
  %v976 = vsel %vm693, %v872, 0.0
  %v977 = vadd.f32 %v975, %v976
  %v978 = vsel %vm693, %v873, 0.0
  %v979 = vadd.f32 %v977, %v978
  %v980 = vsel %vm693, %v874, 0.0
  %v981 = vadd.f32 %v979, %v980
  %v982 = vsel %vm693, %v875, 0.0
  %v983 = vadd.f32 %v981, %v982
  %v984 = vsel %vm693, %v876, 0.0
  %v985 = vadd.f32 %v983, %v984
  %v986 = vsel %vm693, %v877, 0.0
  %v987 = vadd.f32 %v985, %v986
  %v988 = vsel %vm693, %v878, 0.0
  %v989 = vadd.f32 %v987, %v988
  %v990 = vsel %vm693, %v879, 0.0
  %v991 = vadd.f32 %v989, %v990
  %v992 = vsel %vm693, %v880, 0.0
  %v993 = vadd.f32 %v991, %v992
  %v994 = vsel %vm693, %v881, 0.0
  %v995 = vadd.f32 %v993, %v994
  %v996 = vsel %vm693, %v882, 0.0
  %v997 = vadd.f32 %v995, %v996
  %v998 = vsel %vm693, %v883, 0.0
  %v999 = vadd.f32 %v997, %v998
  %v1000 = vsel %vm693, %v884, 0.0
  %v1001 = vadd.f32 %v999, %v1000
  %v1002 = vsel %vm693, %v885, 0.0
  %v1003 = vadd.f32 %v1001, %v1002
  %v1004 = vsel %vm693, %v886, 0.0
  %v1005 = vadd.f32 %v1003, %v1004
  %v1006 = vsel %vm693, %v887, 0.0
  %v1007 = vadd.f32 %v1005, %v1006
  %v1008 = vsel %vm693, %v888, 0.0
  %v1009 = vadd.f32 %v1007, %v1008
  %v1010 = vsel %vm693, %v889, 0.0
  %v1011 = vadd.f32 %v1009, %v1010
  %v1012 = vsel %vm693, %v890, 0.0
  %v1013 = vadd.f32 %v1011, %v1012
  %v1014 = vsel %vm693, %v891, 0.0
  %v1015 = vadd.f32 %v1013, %v1014
  %v1016 = vsel %vm693, %v892, 0.0
  %v1017 = vadd.f32 %v1015, %v1016
  %v1018 = vsel %vm693, %v893, 0.0
  %v1019 = vadd.f32 %v1017, %v1018
  %v1020 = vsel %vm693, %v894, 0.0
  %v1021 = vadd.f32 %v1019, %v1020
  %v1022 = vrot.slane %v1021, 4
  %v1023 = vadd.f32 %v1021, %v1022
  %v1024 = vrot.slane %v1023, 2
  %v1025 = vadd.f32 %v1023, %v1024
  %v1026 = vrot.slane %v1025, 1
  %v1027 = vadd.f32 %v1025, %v1026
  %v1028 = vadd.f32 %v830, %v1027
  %1029 = vst.msk [vmem:[%s4] sm:$0x1] %vm828, %v1028
  %v1030 = vpack.c.bf16 %v441, %v438
  %v1031 = vpack.c.bf16 %v449, %v446
  %v1032 = vpack.c.bf16 %v457, %v454
  %v1033 = vpack.c.bf16 %v465, %v462
  %v1034 = vpack.c.bf16 %v473, %v470
  %v1035 = vpack.c.bf16 %v481, %v478
  %v1036 = vpack.c.bf16 %v489, %v486
  %v1037 = vpack.c.bf16 %v497, %v494
  %v1038 = vpack.c.bf16 %v505, %v502
  %v1039 = vpack.c.bf16 %v513, %v510
  %v1040 = vpack.c.bf16 %v521, %v518
  %v1041 = vpack.c.bf16 %v529, %v526
  %v1042 = vpack.c.bf16 %v537, %v534
  %v1043 = vpack.c.bf16 %v545, %v542
  %v1044 = vpack.c.bf16 %v553, %v550
  %v1045 = vpack.c.bf16 %v561, %v558
  %v1046 = vpack.c.bf16 %v569, %v566
  %v1047 = vpack.c.bf16 %v577, %v574
  %v1048 = vpack.c.bf16 %v585, %v582
  %v1049 = vpack.c.bf16 %v593, %v590
  %v1050 = vpack.c.bf16 %v601, %v598
  %v1051 = vpack.c.bf16 %v609, %v606
  %v1052 = vpack.c.bf16 %v617, %v614
  %v1053 = vpack.c.bf16 %v625, %v622
  %v1054 = vpack.c.bf16 %v633, %v630
  %v1055 = vpack.c.bf16 %v641, %v638
  %v1056 = vpack.c.bf16 %v649, %v646
  %v1057 = vpack.c.bf16 %v657, %v654
  %v1058 = vpack.c.bf16 %v665, %v662
  %v1059 = vpack.c.bf16 %v673, %v670
  %v1060 = vpack.c.bf16 %v681, %v678
  %v1061 = vpack.c.bf16 %v689, %v686
  %v1094 = vunpack.c.l.b16 %v1030
  %v1095 = vunpack.c.h.b16 %v1030
  %v1096 = vunpack.c.l.b16 %v1031
  %v1097 = vunpack.c.h.b16 %v1031
  %v1098 = vunpack.c.l.b16 %v1032
  %v1099 = vunpack.c.h.b16 %v1032
  %v1100 = vunpack.c.l.b16 %v1033
  %v1101 = vunpack.c.h.b16 %v1033
  %v1102 = vunpack.c.l.b16 %v1034
  %v1103 = vunpack.c.h.b16 %v1034
  %v1104 = vunpack.c.l.b16 %v1035
  %v1105 = vunpack.c.h.b16 %v1035
  %v1106 = vunpack.c.l.b16 %v1036
  %v1107 = vunpack.c.h.b16 %v1036
  %v1108 = vunpack.c.l.b16 %v1037
  %v1109 = vunpack.c.h.b16 %v1037
  %v1110 = vunpack.c.l.b16 %v1038
  %v1111 = vunpack.c.h.b16 %v1038
  %v1112 = vunpack.c.l.b16 %v1039
  %v1113 = vunpack.c.h.b16 %v1039
  %v1114 = vunpack.c.l.b16 %v1040
  %v1115 = vunpack.c.h.b16 %v1040
  %v1116 = vunpack.c.l.b16 %v1041
  %v1117 = vunpack.c.h.b16 %v1041
  %v1118 = vunpack.c.l.b16 %v1042
  %v1119 = vunpack.c.h.b16 %v1042
  %v1120 = vunpack.c.l.b16 %v1043
  %v1121 = vunpack.c.h.b16 %v1043
  %v1122 = vunpack.c.l.b16 %v1044
  %v1123 = vunpack.c.h.b16 %v1044
  %v1124 = vunpack.c.l.b16 %v1045
  %v1125 = vunpack.c.h.b16 %v1045
  %v1126 = vunpack.c.l.b16 %v1046
  %v1127 = vunpack.c.h.b16 %v1046
  %v1128 = vunpack.c.l.b16 %v1047
  %v1129 = vunpack.c.h.b16 %v1047
  %v1130 = vunpack.c.l.b16 %v1048
  %v1131 = vunpack.c.h.b16 %v1048
  %v1132 = vunpack.c.l.b16 %v1049
  %v1133 = vunpack.c.h.b16 %v1049
  %v1134 = vunpack.c.l.b16 %v1050
  %v1135 = vunpack.c.h.b16 %v1050
  %v1136 = vunpack.c.l.b16 %v1051
  %v1137 = vunpack.c.h.b16 %v1051
  %v1138 = vunpack.c.l.b16 %v1052
  %v1139 = vunpack.c.h.b16 %v1052
  %v1140 = vunpack.c.l.b16 %v1053
  %v1141 = vunpack.c.h.b16 %v1053
  %v1142 = vunpack.c.l.b16 %v1054
  %v1143 = vunpack.c.h.b16 %v1054
  %v1144 = vunpack.c.l.b16 %v1055
  %v1145 = vunpack.c.h.b16 %v1055
  %v1146 = vunpack.c.l.b16 %v1056
  %v1147 = vunpack.c.h.b16 %v1056
  %v1148 = vunpack.c.l.b16 %v1057
  %v1149 = vunpack.c.h.b16 %v1057
  %v1150 = vunpack.c.l.b16 %v1058
  %v1151 = vunpack.c.h.b16 %v1058
  %v1152 = vunpack.c.l.b16 %v1059
  %v1153 = vunpack.c.h.b16 %v1059
  %v1154 = vunpack.c.l.b16 %v1060
  %v1155 = vunpack.c.h.b16 %v1060
  %v1156 = vunpack.c.l.b16 %v1061
  %v1157 = vunpack.c.h.b16 %v1061
  %v1158 = vpack.c.b16 %v1094, %v1094
  %v1159 = vpack.c.b16 %v1095, %v1095
  %v1160 = vpack.c.b16 %v1096, %v1096
  %v1161 = vpack.c.b16 %v1097, %v1097
  %v1162 = vpack.c.b16 %v1098, %v1098
  %v1163 = vpack.c.b16 %v1099, %v1099
  %v1164 = vpack.c.b16 %v1100, %v1100
  %v1165 = vpack.c.b16 %v1101, %v1101
  %v1166 = vpack.c.b16 %v1102, %v1102
  %v1167 = vpack.c.b16 %v1103, %v1103
  %v1168 = vpack.c.b16 %v1104, %v1104
  %v1169 = vpack.c.b16 %v1105, %v1105
  %v1170 = vpack.c.b16 %v1106, %v1106
  %v1171 = vpack.c.b16 %v1107, %v1107
  %v1172 = vpack.c.b16 %v1108, %v1108
  %v1173 = vpack.c.b16 %v1109, %v1109
  %v1174 = vpack.c.b16 %v1110, %v1110
  %v1175 = vpack.c.b16 %v1111, %v1111
  %v1176 = vpack.c.b16 %v1112, %v1112
  %v1177 = vpack.c.b16 %v1113, %v1113
  %v1178 = vpack.c.b16 %v1114, %v1114
  %v1179 = vpack.c.b16 %v1115, %v1115
  %v1180 = vpack.c.b16 %v1116, %v1116
  %v1181 = vpack.c.b16 %v1117, %v1117
  %v1182 = vpack.c.b16 %v1118, %v1118
  %v1183 = vpack.c.b16 %v1119, %v1119
  %v1184 = vpack.c.b16 %v1120, %v1120
  %v1185 = vpack.c.b16 %v1121, %v1121
  %v1186 = vpack.c.b16 %v1122, %v1122
  %v1187 = vpack.c.b16 %v1123, %v1123
  %v1188 = vpack.c.b16 %v1124, %v1124
  %v1189 = vpack.c.b16 %v1125, %v1125
  %v1190 = vpack.c.b16 %v1126, %v1126
  %v1191 = vpack.c.b16 %v1127, %v1127
  %v1192 = vpack.c.b16 %v1128, %v1128
  %v1193 = vpack.c.b16 %v1129, %v1129
  %v1194 = vpack.c.b16 %v1130, %v1130
  %v1195 = vpack.c.b16 %v1131, %v1131
  %v1196 = vpack.c.b16 %v1132, %v1132
  %v1197 = vpack.c.b16 %v1133, %v1133
  %v1198 = vpack.c.b16 %v1134, %v1134
  %v1199 = vpack.c.b16 %v1135, %v1135
  %v1200 = vpack.c.b16 %v1136, %v1136
  %v1201 = vpack.c.b16 %v1137, %v1137
  %v1202 = vpack.c.b16 %v1138, %v1138
  %v1203 = vpack.c.b16 %v1139, %v1139
  %v1204 = vpack.c.b16 %v1140, %v1140
  %v1205 = vpack.c.b16 %v1141, %v1141
  %v1206 = vpack.c.b16 %v1142, %v1142
  %v1207 = vpack.c.b16 %v1143, %v1143
  %v1208 = vpack.c.b16 %v1144, %v1144
  %v1209 = vpack.c.b16 %v1145, %v1145
  %v1210 = vpack.c.b16 %v1146, %v1146
  %v1211 = vpack.c.b16 %v1147, %v1147
  %v1212 = vpack.c.b16 %v1148, %v1148
  %v1213 = vpack.c.b16 %v1149, %v1149
  %v1214 = vpack.c.b16 %v1150, %v1150
  %v1215 = vpack.c.b16 %v1151, %v1151
  %v1216 = vpack.c.b16 %v1152, %v1152
  %v1217 = vpack.c.b16 %v1153, %v1153
  %v1218 = vpack.c.b16 %v1154, %v1154
  %v1219 = vpack.c.b16 %v1155, %v1155
  %v1220 = vpack.c.b16 %v1156, %v1156
  %v1221 = vpack.c.b16 %v1157, %v1157
  %vm1286 = vcmask 60416
  %1287 = vst.msk [vmem:[%s47] sm:$0xf] %vm1286, %v1158
  %1288 = vst.msk [vmem:[%s47 + $0x4] sm:$0xf] %vm1286, %v1159
  %1289 = vst.msk [vmem:[%s47 + $0x8] sm:$0xf] %vm1286, %v1160
  %1290 = vst.msk [vmem:[%s47 + $0xc] sm:$0xf] %vm1286, %v1161
  %1291 = vst.msk [vmem:[%s47 + $0x10] sm:$0xf] %vm1286, %v1162
  %1292 = vst.msk [vmem:[%s47 + $0x14] sm:$0xf] %vm1286, %v1163
  %1293 = vst.msk [vmem:[%s47 + $0x18] sm:$0xf] %vm1286, %v1164
  %1294 = vst.msk [vmem:[%s47 + $0x1c] sm:$0xf] %vm1286, %v1165
  %1295 = vst.msk [vmem:[%s47 + $0x20] sm:$0xf] %vm1286, %v1166
  %1296 = vst.msk [vmem:[%s47 + $0x24] sm:$0xf] %vm1286, %v1167
  %1297 = vst.msk [vmem:[%s47 + $0x28] sm:$0xf] %vm1286, %v1168
  %1298 = vst.msk [vmem:[%s47 + $0x2c] sm:$0xf] %vm1286, %v1169
  %1299 = vst.msk [vmem:[%s47 + $0x30] sm:$0xf] %vm1286, %v1170
  %1300 = vst.msk [vmem:[%s47 + $0x34] sm:$0xf] %vm1286, %v1171
  %1301 = vst.msk [vmem:[%s47 + $0x38] sm:$0xf] %vm1286, %v1172
  %1302 = vst.msk [vmem:[%s47 + $0x3c] sm:$0xf] %vm1286, %v1173
  %1303 = vst.msk [vmem:[%s47 + $0x40] sm:$0xf] %vm1286, %v1174
  %1304 = vst.msk [vmem:[%s47 + $0x44] sm:$0xf] %vm1286, %v1175
  %1305 = vst.msk [vmem:[%s47 + $0x48] sm:$0xf] %vm1286, %v1176
  %1306 = vst.msk [vmem:[%s47 + $0x4c] sm:$0xf] %vm1286, %v1177
  %1307 = vst.msk [vmem:[%s47 + $0x50] sm:$0xf] %vm1286, %v1178
  %1308 = vst.msk [vmem:[%s47 + $0x54] sm:$0xf] %vm1286, %v1179
  %1309 = vst.msk [vmem:[%s47 + $0x58] sm:$0xf] %vm1286, %v1180
  %1310 = vst.msk [vmem:[%s47 + $0x5c] sm:$0xf] %vm1286, %v1181
  %1311 = vst.msk [vmem:[%s47 + $0x60] sm:$0xf] %vm1286, %v1182
  %1312 = vst.msk [vmem:[%s47 + $0x64] sm:$0xf] %vm1286, %v1183
  %1313 = vst.msk [vmem:[%s47 + $0x68] sm:$0xf] %vm1286, %v1184
  %1314 = vst.msk [vmem:[%s47 + $0x6c] sm:$0xf] %vm1286, %v1185
  %1315 = vst.msk [vmem:[%s47 + $0x70] sm:$0xf] %vm1286, %v1186
  %1316 = vst.msk [vmem:[%s47 + $0x74] sm:$0xf] %vm1286, %v1187
  %1317 = vst.msk [vmem:[%s47 + $0x78] sm:$0xf] %vm1286, %v1188
  %1318 = vst.msk [vmem:[%s47 + $0x7c] sm:$0xf] %vm1286, %v1189
  %1319 = vst.msk [vmem:[%s47 + $0x80] sm:$0xf] %vm1286, %v1190
  %1320 = vst.msk [vmem:[%s47 + $0x84] sm:$0xf] %vm1286, %v1191
  %1321 = vst.msk [vmem:[%s47 + $0x88] sm:$0xf] %vm1286, %v1192
  %1322 = vst.msk [vmem:[%s47 + $0x8c] sm:$0xf] %vm1286, %v1193
  %1323 = vst.msk [vmem:[%s47 + $0x90] sm:$0xf] %vm1286, %v1194
  %1324 = vst.msk [vmem:[%s47 + $0x94] sm:$0xf] %vm1286, %v1195
  %1325 = vst.msk [vmem:[%s47 + $0x98] sm:$0xf] %vm1286, %v1196
  %1326 = vst.msk [vmem:[%s47 + $0x9c] sm:$0xf] %vm1286, %v1197
  %1327 = vst.msk [vmem:[%s47 + $0xa0] sm:$0xf] %vm1286, %v1198
  %1328 = vst.msk [vmem:[%s47 + $0xa4] sm:$0xf] %vm1286, %v1199
  %1329 = vst.msk [vmem:[%s47 + $0xa8] sm:$0xf] %vm1286, %v1200
  %1330 = vst.msk [vmem:[%s47 + $0xac] sm:$0xf] %vm1286, %v1201
  %1331 = vst.msk [vmem:[%s47 + $0xb0] sm:$0xf] %vm1286, %v1202
  %1332 = vst.msk [vmem:[%s47 + $0xb4] sm:$0xf] %vm1286, %v1203
  %1333 = vst.msk [vmem:[%s47 + $0xb8] sm:$0xf] %vm1286, %v1204
  %1334 = vst.msk [vmem:[%s47 + $0xbc] sm:$0xf] %vm1286, %v1205
  %1335 = vst.msk [vmem:[%s47 + $0xc0] sm:$0xf] %vm1286, %v1206
  %1336 = vst.msk [vmem:[%s47 + $0xc4] sm:$0xf] %vm1286, %v1207
  %1337 = vst.msk [vmem:[%s47 + $0xc8] sm:$0xf] %vm1286, %v1208
  %1338 = vst.msk [vmem:[%s47 + $0xcc] sm:$0xf] %vm1286, %v1209
  %1339 = vst.msk [vmem:[%s47 + $0xd0] sm:$0xf] %vm1286, %v1210
  %1340 = vst.msk [vmem:[%s47 + $0xd4] sm:$0xf] %vm1286, %v1211
  %1341 = vst.msk [vmem:[%s47 + $0xd8] sm:$0xf] %vm1286, %v1212
  %1342 = vst.msk [vmem:[%s47 + $0xdc] sm:$0xf] %vm1286, %v1213
  %1343 = vst.msk [vmem:[%s47 + $0xe0] sm:$0xf] %vm1286, %v1214
  %1344 = vst.msk [vmem:[%s47 + $0xe4] sm:$0xf] %vm1286, %v1215
  %1345 = vst.msk [vmem:[%s47 + $0xe8] sm:$0xf] %vm1286, %v1216
  %1346 = vst.msk [vmem:[%s47 + $0xec] sm:$0xf] %vm1286, %v1217
  %1347 = vst.msk [vmem:[%s47 + $0xf0] sm:$0xf] %vm1286, %v1218
  %1348 = vst.msk [vmem:[%s47 + $0xf4] sm:$0xf] %vm1286, %v1219
  %1349 = vst.msk [vmem:[%s47 + $0xf8] sm:$0xf] %vm1286, %v1220
  %1350 = vst.msk [vmem:[%s47 + $0xfc] sm:$0xf] %vm1286, %v1221
  %s1351 = sadd.s32 0, 0
  %s1352 = smul.u32 16, %s1351
  %p1353 = scmp.lt.s32.totalorder %s1352, 15
  %s1354 = scalar_select %p1353, %s1352, 15
  %s1355 = smul.addr %s1354, 4
  %s1356 = scalar_lea.vmem %s2, %s1355
  // Predicated region
  $region14: #{memory_encoder_forward.4} parent=0 // pred_check
    _
  $region15: #{memory_encoder_forward.4} parent=0 // pred_check_branch
    %1358 = sbr.rel (0) target = $region17
  $region16: #{memory_encoder_forward.4} parent=0 // pred_region
    %s1359 = sadd.s32 0, 0
    %s1360 = smul.u32 16, %s1359
  $region17: #{memory_encoder_forward.4} parent=0 // pred_fallthru
    _
  // Predicated region
  $region18: #{memory_encoder_forward.4} parent=0 // pred_check
    _
  $region19: #{memory_encoder_forward.4} parent=0 // pred_check_branch
    %1362 = sbr.rel (0) target = $region21
  $region20: #{memory_encoder_forward.4} parent=0 // pred_region
    _
  $region21: #{memory_encoder_forward.4} parent=0 // pred_fallthru
    _
  // Predicated region
  $region22: #{memory_encoder_forward.4} parent=0 // pred_check
    _
  $region23: #{memory_encoder_forward.4} parent=0 // pred_check_branch
    %1364 = sbr.rel (0) target = $region25
  $region24: #{memory_encoder_forward.4} parent=0 // pred_region
    _
  $region25: #{memory_encoder_forward.4} parent=0 // pred_fallthru
    _
  // Predicated region
  $region26: #{memory_encoder_forward.4} parent=0 // pred_check
    _
  $region27: #{memory_encoder_forward.4} parent=0 // pred_check_branch
    %1366 = sbr.rel (0) target = $region29
  $region28: #{memory_encoder_forward.4} parent=0 // pred_region
    %s1367 = sadd.s32 0, 0
    %s1368 = smul.u32 16, %s1367
    %p1369 = scmp.lt.s32.totalorder %s1368, 15
    %s1370 = scalar_select %p1369, %s1368, 15
    %s1371 = smul.addr %s1370, 4
    %s1372 = scalar_lea.vmem %s2, %s1371
  $region29: #{memory_encoder_forward.4} parent=0 // pred_fallthru
    _
  // Predicated region
  $region30: #{memory_encoder_forward.4} parent=0 // pred_check
    _
  $region31: #{memory_encoder_forward.4} parent=0 // pred_check_branch
    %1374 = sbr.rel (0) target = $region33
  $region32: #{memory_encoder_forward.4} parent=0 // pred_region
    _
  $region33: #{memory_encoder_forward.4} parent=0 // pred_fallthru
    _
  // Predicated region
  $region34: #{memory_encoder_forward.4} parent=0 // pred_check
    _
  $region35: #{memory_encoder_forward.4} parent=0 // pred_check_branch
    %1376 = sbr.rel (0) target = $region37
  $region36: #{memory_encoder_forward.4} parent=0 // pred_region
    _
  $region37: #{memory_encoder_forward.4} parent=0 // pred_fallthru
    _

// kernel: memory_encoder_forward.6
$region0: #{memory_encoder_forward.6}
  #allocation0 [shape = 'u32[]', space=smem, size = 0x4, offset = 0x4, fixed_abs, tag = 'smem constant byte address 0x4 - core index']
  #allocation1 [shape = 'u32[144,128]{1,0:T(1,128)}', space=vmem, size = 0x12000, scoped, tag = 'internal scratch']
  %s0 = inlined_call_operand.vmem [shape: bf16[4,32,72], index: 0, kind: input, shape index: {}]
  %s1 = inlined_call_operand.vmem [shape: bf16[72,16], index: 1, kind: input, shape index: {}]
  %s2 = inlined_call_operand.vmem [shape: bf16[4,32,16], index: 2, kind: output, shape index: {0}]
  %s3 = inlined_call_operand.vmem [shape: f32[1,1,16], index: 3, kind: output, shape index: {1}]
  %s4 = inlined_call_operand.vmem [shape: f32[1,1,16], index: 4, kind: output, shape index: {2}]
  %5 = xla_tuple %s2, %s3, %s4
  %s6 = sld [smem:[#allocation0]]
  $region38: #{memory_encoder_forward.6} parent=0
    _
  %s8 = ssub.s32 1, %s6
  %s9 = scalar_select 0, %s8, %s6
  // Predicated region
  $region2: #{memory_encoder_forward.6} parent=0 // pred_check
    _
  $region3: #{memory_encoder_forward.6} parent=0 // pred_check_branch
    %11 = sbr.rel (0) target = $region5
  $region4: #{memory_encoder_forward.6} parent=0 // pred_region
    %s12 = sadd.s32 0, 0
    %s13 = smul.u32 4, %s12
    %p14 = scmp.lt.s32.totalorder %s13, 3
    %s15 = scalar_select %p14, %s13, 3
    %s16 = smul.addr %s15, 4
    %s17 = scalar_lea.vmem %s0, %s16
    %s18 = sadd.s32 0, 0
    %s19 = smul.u32 4, %s18
  $region5: #{memory_encoder_forward.6} parent=0 // pred_fallthru
    _
  // Predicated region
  $region6: #{memory_encoder_forward.6} parent=0 // pred_check
    _
  $region7: #{memory_encoder_forward.6} parent=0 // pred_check_branch
    %21 = sbr.rel (0) target = $region9
  $region8: #{memory_encoder_forward.6} parent=0 // pred_region
    _
  $region9: #{memory_encoder_forward.6} parent=0 // pred_fallthru
    _
  %s22 = sadd.s32 0, 0
  %s23 = smul.u32 4, %s22
  %p24 = scmp.lt.s32.totalorder %s23, 3
  %s25 = scalar_select %p24, %s23, 3
  %s26 = smul.addr %s25, 4
  %s27 = scalar_lea.vmem %s0, %s26
  %s28 = sadd.s32 0, 0
  %s29 = smul.u32 4, %s28
  %p30 = scmp.lt.s32.totalorder %s29, 3
  %s31 = scalar_select %p30, %s29, 3
  %s32 = smul.addr %s31, 4
  %s33 = scalar_lea.vmem %s2, %s32
  %s34 = sadd.s32 0, 0
  %s35 = smul.u32 4, %s34
  %p36 = scmp.lt.s32.totalorder %s35, 3
  %s37 = scalar_select %p36, %s35, 3
  %s38 = smul.addr %s37, 4
  %s39 = scalar_lea.vmem %s0, %s38
  %s40 = sadd.s32 0, 0
  %s41 = smul.u32 4, %s40
  %s42 = sadd.s32 0, 0
  %s43 = smul.u32 4, %s42
  %p44 = scmp.lt.s32.totalorder %s43, 3
  %s45 = scalar_select %p44, %s43, 3
  %s46 = smul.addr %s45, 4
  %s47 = scalar_lea.vmem %s2, %s46
  %s48 = sadd.s32 0, 0
  %s49 = smul.u32 4, %s48
  %p51 = scmp.eq.s32.totalorder 0, 0
  // Predicated region
  $region10: #{memory_encoder_forward.6} parent=0 // pred_check
    %p52 = pneg %p51
  $region11: #{memory_encoder_forward.6} parent=0 // pred_check_branch
    %54 = sbr.rel (%p52) target = $region13
  $region12: #{memory_encoder_forward.6} parent=0 // pred_region
    %vm55 = vcmask 122880
    %56 = vst.msk [vmem:[%s3] sm:$0x1] %vm55, 0.0
    %57 = vst.msk [vmem:[%s4] sm:$0x1] %vm55, 0.0
  $region13: #{memory_encoder_forward.6} parent=0 // pred_fallthru
    _
  %v58 = vld [vmem:[%s39] sm:$0xf]
  %v59 = vld [vmem:[%s39 + $0x4] sm:$0xf]
  %v60 = vld [vmem:[%s39 + $0x8] sm:$0xf]
  %v61 = vld [vmem:[%s39 + $0xc] sm:$0xf]
  %v62 = vld [vmem:[%s39 + $0x10] sm:$0xf]
  %v63 = vld [vmem:[%s39 + $0x14] sm:$0xf]
  %v64 = vld [vmem:[%s39 + $0x18] sm:$0xf]
  %v65 = vld [vmem:[%s39 + $0x1c] sm:$0xf]
  %v66 = vld [vmem:[%s39 + $0x20] sm:$0xf]
  %v67 = vld [vmem:[%s39 + $0x24] sm:$0xf]
  %v68 = vld [vmem:[%s39 + $0x28] sm:$0xf]
  %v69 = vld [vmem:[%s39 + $0x2c] sm:$0xf]
  %v70 = vld [vmem:[%s39 + $0x30] sm:$0xf]
  %v71 = vld [vmem:[%s39 + $0x34] sm:$0xf]
  %v72 = vld [vmem:[%s39 + $0x38] sm:$0xf]
  %v73 = vld [vmem:[%s39 + $0x3c] sm:$0xf]
  %v74 = vld [vmem:[%s1] sm:$0xf]
  %v75 = vld [vmem:[%s1 + $0x4] sm:$0xf]
  %v76 = vld [vmem:[%s1 + $0x8] sm:$0xf]
  %v77 = vld [vmem:[%s1 + $0xc] sm:$0xf]
  %v78 = vld [vmem:[%s1 + $0x10] sm:$0xf]
  %v79 = vld [vmem:[%s1 + $0x14] sm:$0xf]
  %v80 = vld [vmem:[%s1 + $0x18] sm:$0xf]
  %v81 = vld [vmem:[%s1 + $0x1c] sm:$0xf]
  %v82 = vld [vmem:[%s1 + $0x20] sm:$0xf]
  %v99 = vunpack.c.l.b16 %v58
  %v100 = vunpack.c.l.b16 %v59
  %v101 = vunpack.c.l.b16 %v60
  %v102 = vunpack.c.l.b16 %v61
  %v103 = vunpack.c.l.b16 %v62
  %v104 = vunpack.c.l.b16 %v63
  %v105 = vunpack.c.l.b16 %v64
  %v106 = vunpack.c.l.b16 %v65
  %v107 = vunpack.c.l.b16 %v66
  %v108 = vunpack.c.l.b16 %v67
  %v109 = vunpack.c.l.b16 %v68
  %v110 = vunpack.c.l.b16 %v69
  %v111 = vunpack.c.l.b16 %v70
  %v112 = vunpack.c.l.b16 %v71
  %v113 = vunpack.c.l.b16 %v72
  %v114 = vunpack.c.l.b16 %v73
  %v115 = vpack.c.b16 %v100, %v99
  %v116 = vpack.c.b16 %v102, %v101
  %v117 = vpack.c.b16 %v104, %v103
  %v118 = vpack.c.b16 %v106, %v105
  %v119 = vpack.c.b16 %v108, %v107
  %v120 = vpack.c.b16 %v110, %v109
  %v121 = vpack.c.b16 %v112, %v111
  %v122 = vpack.c.b16 %v114, %v113
  %v132 = vunpack.c.l.b16 %v74
  %v133 = vunpack.c.l.b16 %v75
  %v134 = vunpack.c.l.b16 %v76
  %v135 = vunpack.c.l.b16 %v77
  %v136 = vunpack.c.l.b16 %v78
  %v137 = vunpack.c.l.b16 %v79
  %v138 = vunpack.c.l.b16 %v80
  %v139 = vunpack.c.l.b16 %v81
  %v140 = vunpack.c.l.b16 %v82
  %v141 = vpack.c.b16 %v133, %v132
  %v142 = vpack.c.b16 %v135, %v134
  %v143 = vpack.c.b16 %v137, %v136
  %v144 = vpack.c.b16 %v139, %v138
  %v145 = vpack.c.b16 %v140, %v140
  %vm150 = vcmask 588800
  %v152 = vsel %vm150, %v115, 0
  %v155 = vsel %vm150, %v116, 0
  %v158 = vsel %vm150, %v117, 0
  %v161 = vsel %vm150, %v118, 0
  %v164 = vsel %vm150, %v119, 0
  %v167 = vsel %vm150, %v120, 0
  %v170 = vsel %vm150, %v121, 0
  %v173 = vsel %vm150, %v122, 0
  %vm175 = vcmask 1043456
  %v177 = vsel %vm175, %v145, 0
  %179 = vmatprep.subr.bf16.mxu0 0
  %180 = vmatpush1.bf16.msra.mxu0 %v141
  %181 = vmatprep.subr.bf16.mxu0 0
  %182 = vmatpush1.bf16.msra.mxu0 %v142
  %183 = vmatprep.subr.bf16.mxu0 0
  %184 = vmatpush1.bf16.msra.mxu0 %v143
  %185 = vmatprep.subr.bf16.mxu0 0
  %186 = vmatpush1.bf16.msra.mxu0 %v144
  %187 = vmatprep.subr.bf16.mxu0 0
  %188 = vmatpush1.bf16.msra.mxu0 %v177
  %189 = vmatprep.subr.bf16.mxu0 0
  %190 = vmatpush1.bf16.msra.mxu0 0
  %191 = vmatprep.subr.bf16.mxu0 0
  %192 = vmatpush1.bf16.msra.mxu0 0
  %193 = vmatprep.subr.bf16.mxu0 0
  %194 = vmatpush1.bf16.msra.mxu0 0
  %195 = vmatprep.subr.bf16.mxu0 0
  %196 = vmatpush1.bf16.msra.mxu0 0
  %197 = vmatprep.subr.bf16.mxu0 0
  %198 = vmatpush1.bf16.msra.mxu0 0
  %199 = vmatprep.subr.bf16.mxu0 0
  %200 = vmatpush1.bf16.msra.mxu0 0
  %201 = vmatprep.subr.bf16.mxu0 0
  %202 = vmatpush1.bf16.msra.mxu0 0
  %203 = vmatprep.subr.bf16.mxu0 0
  %204 = vmatpush1.bf16.msra.mxu0 0
  %205 = vmatprep.subr.bf16.mxu0 0
  %206 = vmatpush1.bf16.msra.mxu0 0
  %207 = vmatprep.subr.bf16.mxu0 0
  %208 = vmatpush1.bf16.msra.mxu0 0
  %209 = vmatprep.subr.bf16.mxu0 0
  %210 = vmatpush1.bf16.msra.mxu0 0
  %211 = vmatprep.mubr.bf16.mxu0 0
  %212 = vmatmul.mubr.bf16.gmra.mrb[0].mxu0 %v152
  %v213 = vpop.f32.mrb[0].mxu0
  %v214 = vadd.f32 0.0, %v213
  %v215 = vpop.f32.mrb[0].mxu0
  %v216 = vpop.f32.mrb[0].mxu0
  %v217 = vadd.f32 0.0, %v216
  %v218 = vpop.f32.mrb[0].mxu0
  %219 = vmatprep.mubr.bf16.mxu0 0
  %220 = vmatmul.mubr.bf16.gmra.mrb[0].mxu0 %v155
  %v221 = vpop.f32.mrb[0].mxu0
  %v222 = vadd.f32 0.0, %v221
  %v223 = vpop.f32.mrb[0].mxu0
  %v224 = vpop.f32.mrb[0].mxu0
  %v225 = vadd.f32 0.0, %v224
  %v226 = vpop.f32.mrb[0].mxu0
  %227 = vmatprep.mubr.bf16.mxu0 0
  %228 = vmatmul.mubr.bf16.gmra.mrb[0].mxu0 %v158
  %v229 = vpop.f32.mrb[0].mxu0
  %v230 = vadd.f32 0.0, %v229
  %v231 = vpop.f32.mrb[0].mxu0
  %v232 = vpop.f32.mrb[0].mxu0
  %v233 = vadd.f32 0.0, %v232
  %v234 = vpop.f32.mrb[0].mxu0
  %235 = vmatprep.mubr.bf16.mxu0 0
  %236 = vmatmul.mubr.bf16.gmra.mrb[0].mxu0 %v161
  %v237 = vpop.f32.mrb[0].mxu0
  %v238 = vadd.f32 0.0, %v237
  %v239 = vpop.f32.mrb[0].mxu0
  %v240 = vpop.f32.mrb[0].mxu0
  %v241 = vadd.f32 0.0, %v240
  %v242 = vpop.f32.mrb[0].mxu0
  %243 = vmatprep.mubr.bf16.mxu0 0
  %244 = vmatmul.mubr.bf16.gmra.mrb[0].mxu0 %v164
  %v245 = vpop.f32.mrb[0].mxu0
  %v246 = vadd.f32 0.0, %v245
  %v247 = vpop.f32.mrb[0].mxu0
  %v248 = vpop.f32.mrb[0].mxu0
  %v249 = vadd.f32 0.0, %v248
  %v250 = vpop.f32.mrb[0].mxu0
  %251 = vmatprep.mubr.bf16.mxu0 0
  %252 = vmatmul.mubr.bf16.gmra.mrb[0].mxu0 %v167
  %v253 = vpop.f32.mrb[0].mxu0
  %v254 = vadd.f32 0.0, %v253
  %v255 = vpop.f32.mrb[0].mxu0
  %v256 = vpop.f32.mrb[0].mxu0
  %v257 = vadd.f32 0.0, %v256
  %v258 = vpop.f32.mrb[0].mxu0
  %259 = vmatprep.mubr.bf16.mxu0 0
  %260 = vmatmul.mubr.bf16.gmra.mrb[0].mxu0 %v170
  %v261 = vpop.f32.mrb[0].mxu0
  %v262 = vadd.f32 0.0, %v261
  %v263 = vpop.f32.mrb[0].mxu0
  %v264 = vpop.f32.mrb[0].mxu0
  %v265 = vadd.f32 0.0, %v264
  %v266 = vpop.f32.mrb[0].mxu0
  %267 = vmatprep.mubr.bf16.mxu0 0
  %268 = vmatmul.mubr.bf16.gmra.mrb[0].mxu0 %v173
  %v269 = vpop.f32.mrb[0].mxu0
  %v270 = vadd.f32 0.0, %v269
  %v271 = vpop.f32.mrb[0].mxu0
  %v272 = vpop.f32.mrb[0].mxu0
  %v273 = vadd.f32 0.0, %v272
  %v274 = vpop.f32.mrb[0].mxu0
  %275 = vdwg.mxu0
  %v276 = vld [vmem:[%s3] sm:$0x1]
  %vm277 = vcmask 130048
  %v278 = vsel %vm277, %v214, 0.0
  %v279 = vsel %vm277, %v217, 0.0
  %v280 = vadd.f32 %v278, %v279
  %v281 = vsel %vm277, %v222, 0.0
  %v282 = vadd.f32 %v280, %v281
  %v283 = vsel %vm277, %v225, 0.0
  %v284 = vadd.f32 %v282, %v283
  %v285 = vsel %vm277, %v230, 0.0
  %v286 = vadd.f32 %v284, %v285
  %v287 = vsel %vm277, %v233, 0.0
  %v288 = vadd.f32 %v286, %v287
  %v289 = vsel %vm277, %v238, 0.0
  %v290 = vadd.f32 %v288, %v289
  %v291 = vsel %vm277, %v241, 0.0
  %v292 = vadd.f32 %v290, %v291
  %v293 = vsel %vm277, %v246, 0.0
  %v294 = vadd.f32 %v292, %v293
  %v295 = vsel %vm277, %v249, 0.0
  %v296 = vadd.f32 %v294, %v295
  %v297 = vsel %vm277, %v254, 0.0
  %v298 = vadd.f32 %v296, %v297
  %v299 = vsel %vm277, %v257, 0.0
  %v300 = vadd.f32 %v298, %v299
  %v301 = vsel %vm277, %v262, 0.0
  %v302 = vadd.f32 %v300, %v301
  %v303 = vsel %vm277, %v265, 0.0
  %v304 = vadd.f32 %v302, %v303
  %v305 = vsel %vm277, %v270, 0.0
  %v306 = vadd.f32 %v304, %v305
  %v307 = vsel %vm277, %v273, 0.0
  %v308 = vadd.f32 %v306, %v307
  %v309 = vrot.slane %v308, 4
  %v310 = vadd.f32 %v308, %v309
  %v311 = vrot.slane %v310, 2
  %v312 = vadd.f32 %v310, %v311
  %v313 = vrot.slane %v312, 1
  %v314 = vadd.f32 %v312, %v313
  %v315 = vadd.f32 %v276, %v314
  %vm316 = vcmask 122880
  %317 = vst.msk [vmem:[%s3] sm:$0x1] %vm316, %v315
  %v318 = vld [vmem:[%s4] sm:$0x1]
  %v319 = vmul.f32 %v214, %v214
  %v320 = vmul.f32 %v217, %v217
  %v321 = vmul.f32 %v222, %v222
  %v322 = vmul.f32 %v225, %v225
  %v323 = vmul.f32 %v230, %v230
  %v324 = vmul.f32 %v233, %v233
  %v325 = vmul.f32 %v238, %v238
  %v326 = vmul.f32 %v241, %v241
  %v327 = vmul.f32 %v246, %v246
  %v328 = vmul.f32 %v249, %v249
  %v329 = vmul.f32 %v254, %v254
  %v330 = vmul.f32 %v257, %v257
  %v331 = vmul.f32 %v262, %v262
  %v332 = vmul.f32 %v265, %v265
  %v333 = vmul.f32 %v270, %v270
  %v334 = vmul.f32 %v273, %v273
  %v335 = vsel %vm277, %v319, 0.0
  %v336 = vsel %vm277, %v320, 0.0
  %v337 = vadd.f32 %v335, %v336
  %v338 = vsel %vm277, %v321, 0.0
  %v339 = vadd.f32 %v337, %v338
  %v340 = vsel %vm277, %v322, 0.0
  %v341 = vadd.f32 %v339, %v340
  %v342 = vsel %vm277, %v323, 0.0
  %v343 = vadd.f32 %v341, %v342
  %v344 = vsel %vm277, %v324, 0.0
  %v345 = vadd.f32 %v343, %v344
  %v346 = vsel %vm277, %v325, 0.0
  %v347 = vadd.f32 %v345, %v346
  %v348 = vsel %vm277, %v326, 0.0
  %v349 = vadd.f32 %v347, %v348
  %v350 = vsel %vm277, %v327, 0.0
  %v351 = vadd.f32 %v349, %v350
  %v352 = vsel %vm277, %v328, 0.0
  %v353 = vadd.f32 %v351, %v352
  %v354 = vsel %vm277, %v329, 0.0
  %v355 = vadd.f32 %v353, %v354
  %v356 = vsel %vm277, %v330, 0.0
  %v357 = vadd.f32 %v355, %v356
  %v358 = vsel %vm277, %v331, 0.0
  %v359 = vadd.f32 %v357, %v358
  %v360 = vsel %vm277, %v332, 0.0
  %v361 = vadd.f32 %v359, %v360
  %v362 = vsel %vm277, %v333, 0.0
  %v363 = vadd.f32 %v361, %v362
  %v364 = vsel %vm277, %v334, 0.0
  %v365 = vadd.f32 %v363, %v364
  %v366 = vrot.slane %v365, 4
  %v367 = vadd.f32 %v365, %v366
  %v368 = vrot.slane %v367, 2
  %v369 = vadd.f32 %v367, %v368
  %v370 = vrot.slane %v369, 1
  %v371 = vadd.f32 %v369, %v370
  %v372 = vadd.f32 %v318, %v371
  %373 = vst.msk [vmem:[%s4] sm:$0x1] %vm316, %v372
  %v374 = vpack.c.bf16 %v217, %v214
  %v375 = vpack.c.bf16 %v225, %v222
  %v376 = vpack.c.bf16 %v233, %v230
  %v377 = vpack.c.bf16 %v241, %v238
  %v378 = vpack.c.bf16 %v249, %v246
  %v379 = vpack.c.bf16 %v257, %v254
  %v380 = vpack.c.bf16 %v265, %v262
  %v381 = vpack.c.bf16 %v273, %v270
  %v390 = vunpack.c.l.b16 %v374
  %v391 = vunpack.c.h.b16 %v374
  %v392 = vunpack.c.l.b16 %v375
  %v393 = vunpack.c.h.b16 %v375
  %v394 = vunpack.c.l.b16 %v376
  %v395 = vunpack.c.h.b16 %v376
  %v396 = vunpack.c.l.b16 %v377
  %v397 = vunpack.c.h.b16 %v377
  %v398 = vunpack.c.l.b16 %v378
  %v399 = vunpack.c.h.b16 %v378
  %v400 = vunpack.c.l.b16 %v379
  %v401 = vunpack.c.h.b16 %v379
  %v402 = vunpack.c.l.b16 %v380
  %v403 = vunpack.c.h.b16 %v380
  %v404 = vunpack.c.l.b16 %v381
  %v405 = vunpack.c.h.b16 %v381
  %v406 = vpack.c.b16 %v390, %v390
  %v407 = vpack.c.b16 %v391, %v391
  %v408 = vpack.c.b16 %v392, %v392
  %v409 = vpack.c.b16 %v393, %v393
  %v410 = vpack.c.b16 %v394, %v394
  %v411 = vpack.c.b16 %v395, %v395
  %v412 = vpack.c.b16 %v396, %v396
  %v413 = vpack.c.b16 %v397, %v397
  %v414 = vpack.c.b16 %v398, %v398
  %v415 = vpack.c.b16 %v399, %v399
  %v416 = vpack.c.b16 %v400, %v400
  %v417 = vpack.c.b16 %v401, %v401
  %v418 = vpack.c.b16 %v402, %v402
  %v419 = vpack.c.b16 %v403, %v403
  %v420 = vpack.c.b16 %v404, %v404
  %v421 = vpack.c.b16 %v405, %v405
  %vm438 = vcmask 125952
  %439 = vst.msk [vmem:[%s47] sm:$0xf] %vm438, %v406
  %440 = vst.msk [vmem:[%s47 + $0x4] sm:$0xf] %vm438, %v407
  %441 = vst.msk [vmem:[%s47 + $0x8] sm:$0xf] %vm438, %v408
  %442 = vst.msk [vmem:[%s47 + $0xc] sm:$0xf] %vm438, %v409
  %443 = vst.msk [vmem:[%s47 + $0x10] sm:$0xf] %vm438, %v410
  %444 = vst.msk [vmem:[%s47 + $0x14] sm:$0xf] %vm438, %v411
  %445 = vst.msk [vmem:[%s47 + $0x18] sm:$0xf] %vm438, %v412
  %446 = vst.msk [vmem:[%s47 + $0x1c] sm:$0xf] %vm438, %v413
  %447 = vst.msk [vmem:[%s47 + $0x20] sm:$0xf] %vm438, %v414
  %448 = vst.msk [vmem:[%s47 + $0x24] sm:$0xf] %vm438, %v415
  %449 = vst.msk [vmem:[%s47 + $0x28] sm:$0xf] %vm438, %v416
  %450 = vst.msk [vmem:[%s47 + $0x2c] sm:$0xf] %vm438, %v417
  %451 = vst.msk [vmem:[%s47 + $0x30] sm:$0xf] %vm438, %v418
  %452 = vst.msk [vmem:[%s47 + $0x34] sm:$0xf] %vm438, %v419
  %453 = vst.msk [vmem:[%s47 + $0x38] sm:$0xf] %vm438, %v420
  %454 = vst.msk [vmem:[%s47 + $0x3c] sm:$0xf] %vm438, %v421
  %s455 = sadd.s32 0, 0
  %s456 = smul.u32 4, %s455
  %p457 = scmp.lt.s32.totalorder %s456, 3
  %s458 = scalar_select %p457, %s456, 3
  %s459 = smul.addr %s458, 4
  %s460 = scalar_lea.vmem %s2, %s459
  // Predicated region
  $region14: #{memory_encoder_forward.6} parent=0 // pred_check
    _
  $region15: #{memory_encoder_forward.6} parent=0 // pred_check_branch
    %462 = sbr.rel (0) target = $region17
  $region16: #{memory_encoder_forward.6} parent=0 // pred_region
    %s463 = sadd.s32 0, 0
    %s464 = smul.u32 4, %s463
  $region17: #{memory_encoder_forward.6} parent=0 // pred_fallthru
    _
  // Predicated region
  $region18: #{memory_encoder_forward.6} parent=0 // pred_check
    _
  $region19: #{memory_encoder_forward.6} parent=0 // pred_check_branch
    %466 = sbr.rel (0) target = $region21
  $region20: #{memory_encoder_forward.6} parent=0 // pred_region
    _
  $region21: #{memory_encoder_forward.6} parent=0 // pred_fallthru
    _
  // Predicated region
  $region22: #{memory_encoder_forward.6} parent=0 // pred_check
    _
  $region23: #{memory_encoder_forward.6} parent=0 // pred_check_branch
    %468 = sbr.rel (0) target = $region25
  $region24: #{memory_encoder_forward.6} parent=0 // pred_region
    _
  $region25: #{memory_encoder_forward.6} parent=0 // pred_fallthru
    _
  // Predicated region
  $region26: #{memory_encoder_forward.6} parent=0 // pred_check
    _
  $region27: #{memory_encoder_forward.6} parent=0 // pred_check_branch
    %470 = sbr.rel (0) target = $region29
  $region28: #{memory_encoder_forward.6} parent=0 // pred_region
    %s471 = sadd.s32 0, 0
    %s472 = smul.u32 4, %s471
    %p473 = scmp.lt.s32.totalorder %s472, 3
    %s474 = scalar_select %p473, %s472, 3
    %s475 = smul.addr %s474, 4
    %s476 = scalar_lea.vmem %s2, %s475
  $region29: #{memory_encoder_forward.6} parent=0 // pred_fallthru
    _
  // Predicated region
  $region30: #{memory_encoder_forward.6} parent=0 // pred_check
    _
  $region31: #{memory_encoder_forward.6} parent=0 // pred_check_branch
    %478 = sbr.rel (0) target = $region33
  $region32: #{memory_encoder_forward.6} parent=0 // pred_region
    _
  $region33: #{memory_encoder_forward.6} parent=0 // pred_fallthru
    _
  // Predicated region
  $region34: #{memory_encoder_forward.6} parent=0 // pred_check
    _
  $region35: #{memory_encoder_forward.6} parent=0 // pred_check_branch
    %480 = sbr.rel (0) target = $region37
  $region36: #{memory_encoder_forward.6} parent=0 // pred_region
    _
  $region37: #{memory_encoder_forward.6} parent=0 // pred_fallthru
    _

</llo_original>
